<compile_context>
chip_gen: v6e
topology: v6e:2x2x1
jax: 0.10.0
libtpu: 0.0.40
codegen_flags: <defaults>
</compile_context>

<pallas_src>
import numpy as np
import jax
import jax.numpy as jnp
from jax.experimental import pallas as pl
from jax.experimental.pallas import tpu as pltpu


# ---------------------------------------------------------------------------
# Kernel
# ---------------------------------------------------------------------------
def _make_kernel(nx: int, row_fallback: bool):
    """nx: number of feature inputs (1 or 2)."""

    def kernel(*refs):
        x_refs = refs[:nx]                                   # each (1, C, H*W)
        w_ref, b_ref, mwt_ref, mh_ref, o_ref = refs[nx:nx + 5]
        scratch = refs[nx + 5:]
        t_ref = scratch[0]                                   # (H, Tco*W2) f32 scratch

        Tco = w_ref.shape[0]
        W, W2 = mwt_ref.shape
        H2, H = mh_ref.shape

        # (1) skip-add on the whole (C, H*W) slab (no per-row slicing).
        s = x_refs[0][0]
        if nx == 2:
            s = s + x_refs[1][0]

        # (2) 1x1 conv (bias deferred): ONE MXU matmul, N = H*W.
        y = jnp.dot(w_ref[...], s, preferred_element_type=jnp.float32)       # (Tco, H*W)

        # (3) width upsample.
        if not row_fallback:
            # Single matmul with M = Tco*H (fills the MXU; no per-row gathers/scatters).
            zw = jnp.dot(y.reshape(Tco * H, W), mwt_ref[...],
                         preferred_element_type=jnp.float32)                 # (Tco*H, W2)
            # (4) layout fix (Tco, H, W2) -> (H, Tco*W2): Tco contiguous slab copies
            #     through VMEM scratch -- no 3-D transpose, no broadcast of Mh.
            for o in range(Tco):
                t_ref[:, o * W2:(o + 1) * W2] = zw[o * H:(o + 1) * H, :]
        else:
            # Lowering-compatibility fallback only (used if the lane-splitting reshape
            # above is rejected by Mosaic): per-row width matmuls, identical math.
            zr_ref = scratch[1]                              # (Tco, H, W2) f32
            for h in range(H):
                zr_ref[:, h, :] = jnp.dot(y[:, h * W:(h + 1) * W], mwt_ref[...],
                                          preferred_element_type=jnp.float32)
            z3 = zr_ref[...]
            for o in range(Tco):
                t_ref[:, o * W2:(o + 1) * W2] = z3[o]

        # (5) height upsample: single matmul (H2, H) @ (H, Tco*W2).
        u = jnp.dot(mh_ref[...], t_ref[...],
                    preferred_element_type=jnp.float32)                      # (H2, Tco*W2)

        # (6) bias added once; each output channel written as a contiguous (H2, W2) slab.
        b = b_ref[...]                                                        # (Tco, 1)
        for o in range(Tco):
            o_ref[0, o] = (u[:, o * W2:(o + 1) * W2] + b[o:o + 1, :]).astype(o_ref.dtype)

    return kernel


# ---------------------------------------------------------------------------
# Bilinear (align_corners=True) interpolation matrix, scale factor 2
# ---------------------------------------------------------------------------
def _interp_matrix_np(n_in: int, n_out: int) -> np.ndarray:
    m = np.zeros((n_out, n_in), dtype=np.float32)
    if n_in == 1:
        m[:, 0] = 1.0
        return m
    scale = (n_in - 1) / (n_out - 1)                 # align_corners=True mapping
    for i in range(n_out):
        src = i * scale
        i0 = min(int(np.floor(src)), n_in - 1)
        i1 = min(i0 + 1, n_in - 1)
        f = src - i0
        m[i, i0] += 1.0 - f
        m[i, i1] += f
    return m


def _pick_cout_tile(cout: int) -> int:
    # BlockSpec needs the Cout tile to be a multiple of 8 or equal to Cout.
    if cout % 16 == 0:
        return 16
    if cout % 8 == 0:
        return 8
    return cout


# ---------------------------------------------------------------------------
# Wrapper (FeatureFusionBlock.forward)
# ---------------------------------------------------------------------------
def feature_fusion_block(xs, weight, bias):
    """xs: tuple of 1 or 2 NCHW arrays.  weight: (Cout, Cin).  bias: (Cout,)."""
    x1 = xs[0]
    N, C, H, W = x1.shape
    H2, W2 = 2 * H, 2 * W
    Cout = weight.shape[0]
    Tco = _pick_cout_tile(Cout)
    J = Cout // Tco

    mh = jnp.asarray(_interp_matrix_np(H, H2))            # (H2, H)   few KB
    mwt = jnp.asarray(_interp_matrix_np(W, W2).T)         # (W,  W2)  few KB
    w32 = weight.astype(jnp.float32)
    b2 = bias.reshape(Cout, 1).astype(jnp.float32)

    # Free metadata reshape: feed the kernel (C, H*W) directly (no in-kernel input relayout).
    xf = [x.reshape(N, C, H * W) for x in xs]

    def build(row_fallback):
        spec_x = pl.BlockSpec((1, C, H * W), lambda n, j: (n, 0, 0))
        in_specs = [spec_x] * len(xs) + [
            pl.BlockSpec((Tco, C), lambda n, j: (j, 0)),    # weight tile
            pl.BlockSpec((Tco, 1), lambda n, j: (j, 0)),    # bias tile
            pl.BlockSpec((W, W2), lambda n, j: (0, 0)),     # Mw^T, resident
            pl.BlockSpec((H2, H), lambda n, j: (0, 0)),     # Mh,   resident
        ]
        out_spec = pl.BlockSpec((1, Tco, H2, W2), lambda n, j: (n, j, 0, 0))
        scratch = [pltpu.VMEM((H, Tco * W2), jnp.float32)]
        if row_fallback:
            scratch.append(pltpu.VMEM((Tco, H, W2), jnp.float32))
        return pl.pallas_call(
            _make_kernel(len(xs), row_fallback),
            out_shape=jax.ShapeDtypeStruct((N, Cout, H2, W2), x1.dtype),
            grid=(N, J),
            in_specs=in_specs,
            out_specs=out_spec,
            scratch_shapes=scratch,
            compiler_params=pltpu.CompilerParams(
                # Cout-tile axis keeps both v7x TensorCores busy even at N=1.
                dimension_semantics=("parallel", "parallel"),
                # Per-step footprint: inputs (C*H*W*4 each, double-buffered) + output tile
                # (Tco*H2*W2*4, double-buffered) + (H, Tco*W2) scratch -- well under budget.
                vmem_limit_bytes=64 * 1024 * 1024,
            ),
        )(*xf, w32, b2, mwt, mh)

    try:
        return build(row_fallback=False)
    except Exception:
        # Compatibility fallback only; the primary whole-slab path is the intended one.
        return build(row_fallback=True)


# ---------------------------------------------------------------------------
# Pure-JAX reference (matches the PyTorch module: add -> upsample -> conv)
# ---------------------------------------------------------------------------
def _ref_forward(xs, weight, bias):
    s = xs[0] if len(xs) == 1 else xs[0] + xs[1]
    N, C, H, W = s.shape
    mh = jnp.asarray(_interp_matrix_np(H, 2 * H))
    mw = jnp.asarray(_interp_matrix_np(W, 2 * W))
    up = jnp.einsum("ph,nchw,qw->ncpq", mh, s, mw)
    out = jnp.einsum("oc,ncpq->nopq", weight, up) + bias[None, :, None, None]
    return out


# ---------------------------------------------------------------------------
if __name__ == "__main__":
    key = jax.random.PRNGKey(0)
    k1, k2, k3, k4 = jax.random.split(key, 4)

    # features=4, expand=False -> out_features=4
    N, C, H, W = 2, 4, 16, 16
    x1 = jax.random.normal(k1, (N, C, H, W), dtype=jnp.float32)
    x2 = jax.random.normal(k2, (N, C, H, W), dtype=jnp.float32)
    weight = 0.1 * jax.random.normal(k3, (C, C), dtype=jnp.float32)
    bias = 0.1 * jax.random.normal(k4, (C,), dtype=jnp.float32)

    # two-input path (skip add)
    out2 = jax.block_until_ready(feature_fusion_block((x1, x2), weight, bias))
    ref2 = _ref_forward((x1, x2), weight, bias)
    assert out2.shape == (N, C, 2 * H, 2 * W)
    assert jnp.allclose(out2, ref2, atol=1e-4, rtol=1e-4)

    # single-input path
    out1 = jax.block_until_ready(feature_fusion_block((x1,), weight, bias))
    ref1 = _ref_forward((x1,), weight, bias)
    assert jnp.allclose(out1, ref1, atol=1e-4, rtol=1e-4)

    print("KERNEL_OK")
</pallas_src>

<mosaic_0001>
module attributes {stable_mosaic.version = 11 : i64} {
  func.func @kernel(%arg0: i32, %arg1: i32, %arg2: memref<1x4x256xf32, #tpu.memory_space<vmem>>, %arg3: memref<1x4x256xf32, #tpu.memory_space<vmem>>, %arg4: memref<4x4xf32, #tpu.memory_space<vmem>>, %arg5: memref<4x1xf32, #tpu.memory_space<vmem>>, %arg6: memref<16x32xf32, #tpu.memory_space<vmem>>, %arg7: memref<32x16xf32, #tpu.memory_space<vmem>>, %arg8: memref<1x4x32x32xf32, #tpu.memory_space<vmem>>, %arg9: memref<16x128xf32, #tpu.memory_space<vmem>>) attributes {dimension_semantics = [#tpu.dimension_semantics<parallel>, #tpu.dimension_semantics<parallel>], iteration_bounds = array<i64: 2, 1>, scalar_prefetch = 0 : i64, scratch_operands = 1 : i64, tpu.core_type = #tpu.core_type<tc>, window_params = [{transform_indices = @transform_0, window_bounds = array<i64: 1, 4, 256>}, {transform_indices = @transform_1, window_bounds = array<i64: 1, 4, 256>}, {transform_indices = @transform_2, window_bounds = array<i64: 4, 4>}, {transform_indices = @transform_3, window_bounds = array<i64: 4, 1>}, {pipeline_mode = #tpu.pipeline_mode<synchronous>, transform_indices = @transform_4, window_bounds = array<i64: 16, 32>}, {pipeline_mode = #tpu.pipeline_mode<synchronous>, transform_indices = @transform_5, window_bounds = array<i64: 32, 16>}, {transform_indices = @transform_6, window_bounds = array<i64: 1, 4, 32, 32>}]} {
    %c0 = arith.constant 0 : index
    %c0_0 = arith.constant 0 : index
    %c0_1 = arith.constant 0 : index
    %0 = vector.load %arg2[%c0, %c0_0, %c0_1] : memref<1x4x256xf32, #tpu.memory_space<vmem>>, vector<1x4x256xf32>
    %1 = vector.shape_cast %0 : vector<1x4x256xf32> to vector<4x256xf32>
    %c0_2 = arith.constant 0 : index
    %c0_3 = arith.constant 0 : index
    %c0_4 = arith.constant 0 : index
    %2 = vector.load %arg3[%c0_2, %c0_3, %c0_4] : memref<1x4x256xf32, #tpu.memory_space<vmem>>, vector<1x4x256xf32>
    %3 = vector.shape_cast %2 : vector<1x4x256xf32> to vector<4x256xf32>
    %4 = arith.addf %1, %3 : vector<4x256xf32>
    %c0_5 = arith.constant 0 : index
    %c0_6 = arith.constant 0 : index
    %5 = vector.load %arg4[%c0_5, %c0_6] : memref<4x4xf32, #tpu.memory_space<vmem>>, vector<4x4xf32>
    %cst = arith.constant dense<0.000000e+00> : vector<4x256xf32>
    %6 = tpu.matmul %5, %4, %cst {dimension_numbers = #tpu.dot_dimension_numbers<[1], [0], [0], [1], [0, 0, 1, 1], [], []>} : vector<4x4xf32>, vector<4x256xf32>, vector<4x256xf32> -> vector<4x256xf32>
    %7 = vector.shape_cast %6 : vector<4x256xf32> to vector<64x16xf32>
    %c0_7 = arith.constant 0 : index
    %c0_8 = arith.constant 0 : index
    %8 = vector.load %arg6[%c0_7, %c0_8] : memref<16x32xf32, #tpu.memory_space<vmem>>, vector<16x32xf32>
    %cst_9 = arith.constant dense<0.000000e+00> : vector<64x32xf32>
    %9 = tpu.matmul %7, %8, %cst_9 {dimension_numbers = #tpu.dot_dimension_numbers<[1], [0], [0], [1], [0, 0, 1, 1], [], []>} : vector<64x16xf32>, vector<16x32xf32>, vector<64x32xf32> -> vector<64x32xf32>
    %10 = vector.extract_strided_slice %9 {offsets = [0, 0], sizes = [16, 32], strides = [1, 1]} : vector<64x32xf32> to vector<16x32xf32>
    %c0_10 = arith.constant 0 : index
    %c0_11 = arith.constant 0 : index
    %11 = vector.load %arg9[%c0_10, %c0_11] : memref<16x128xf32, #tpu.memory_space<vmem>>, vector<16x32xf32>
    tpu.vector_store %arg9[%c0_10, %c0_11], %10 {strides = array<i32>} : memref<16x128xf32, #tpu.memory_space<vmem>>, vector<16x32xf32>,
    %12 = vector.extract_strided_slice %9 {offsets = [16, 0], sizes = [16, 32], strides = [1, 1]} : vector<64x32xf32> to vector<16x32xf32>
    %c0_12 = arith.constant 0 : index
    %c32 = arith.constant 32 : index
    %13 = vector.load %arg9[%c0_12, %c32] : memref<16x128xf32, #tpu.memory_space<vmem>>, vector<16x32xf32>
    tpu.vector_store %arg9[%c0_12, %c32], %12 {strides = array<i32>} : memref<16x128xf32, #tpu.memory_space<vmem>>, vector<16x32xf32>,
    %14 = vector.extract_strided_slice %9 {offsets = [32, 0], sizes = [16, 32], strides = [1, 1]} : vector<64x32xf32> to vector<16x32xf32>
    %c0_13 = arith.constant 0 : index
    %c64 = arith.constant 64 : index
    %15 = vector.load %arg9[%c0_13, %c64] : memref<16x128xf32, #tpu.memory_space<vmem>>, vector<16x32xf32>
    tpu.vector_store %arg9[%c0_13, %c64], %14 {strides = array<i32>} : memref<16x128xf32, #tpu.memory_space<vmem>>, vector<16x32xf32>,
    %16 = vector.extract_strided_slice %9 {offsets = [48, 0], sizes = [16, 32], strides = [1, 1]} : vector<64x32xf32> to vector<16x32xf32>
    %c0_14 = arith.constant 0 : index
    %c96 = arith.constant 96 : index
    %17 = vector.load %arg9[%c0_14, %c96] : memref<16x128xf32, #tpu.memory_space<vmem>>, vector<16x32xf32>
    tpu.vector_store %arg9[%c0_14, %c96], %16 {strides = array<i32>} : memref<16x128xf32, #tpu.memory_space<vmem>>, vector<16x32xf32>,
    %c0_15 = arith.constant 0 : index
    %c0_16 = arith.constant 0 : index
    %18 = vector.load %arg7[%c0_15, %c0_16] : memref<32x16xf32, #tpu.memory_space<vmem>>, vector<32x16xf32>
    %c0_17 = arith.constant 0 : index
    %c0_18 = arith.constant 0 : index
    %19 = vector.load %arg9[%c0_17, %c0_18] : memref<16x128xf32, #tpu.memory_space<vmem>>, vector<16x128xf32>
    %cst_19 = arith.constant dense<0.000000e+00> : vector<32x128xf32>
    %20 = tpu.matmul %18, %19, %cst_19 {dimension_numbers = #tpu.dot_dimension_numbers<[1], [0], [0], [1], [0, 0, 1, 1], [], []>} : vector<32x16xf32>, vector<16x128xf32>, vector<32x128xf32> -> vector<32x128xf32>
    %c0_20 = arith.constant 0 : index
    %c0_21 = arith.constant 0 : index
    %21 = vector.load %arg5[%c0_20, %c0_21] : memref<4x1xf32, #tpu.memory_space<vmem>>, vector<4x1xf32>
    %22 = vector.extract_strided_slice %20 {offsets = [0, 0], sizes = [32, 32], strides = [1, 1]} : vector<32x128xf32> to vector<32x32xf32>
    %23 = vector.extract_strided_slice %21 {offsets = [0, 0], sizes = [1, 1], strides = [1, 1]} : vector<4x1xf32> to vector<1x1xf32>
    %24 = vector.broadcast %23 : vector<1x1xf32> to vector<32x32xf32>
    %25 = arith.addf %22, %24 : vector<32x32xf32>
    %c0_22 = arith.constant 0 : index
    %c0_23 = arith.constant 0 : index
    %c0_24 = arith.constant 0 : index
    %c0_25 = arith.constant 0 : index
    %26 = vector.load %arg8[%c0_22, %c0_23, %c0_24, %c0_25] : memref<1x4x32x32xf32, #tpu.memory_space<vmem>>, vector<1x1x32x32xf32>
    %27 = vector.shape_cast %26 : vector<1x1x32x32xf32> to vector<32x32xf32>
    %28 = vector.shape_cast %25 : vector<32x32xf32> to vector<1x1x32x32xf32>
    tpu.vector_store %arg8[%c0_22, %c0_23, %c0_24, %c0_25], %28 {strides = array<i32>} : memref<1x4x32x32xf32, #tpu.memory_space<vmem>>, vector<1x1x32x32xf32>,
    %29 = vector.extract_strided_slice %20 {offsets = [0, 32], sizes = [32, 32], strides = [1, 1]} : vector<32x128xf32> to vector<32x32xf32>
    %30 = vector.extract_strided_slice %21 {offsets = [1, 0], sizes = [1, 1], strides = [1, 1]} : vector<4x1xf32> to vector<1x1xf32>
    %31 = vector.broadcast %30 : vector<1x1xf32> to vector<32x32xf32>
    %32 = arith.addf %29, %31 : vector<32x32xf32>
    %c0_26 = arith.constant 0 : index
    %c1 = arith.constant 1 : index
    %c0_27 = arith.constant 0 : index
    %c0_28 = arith.constant 0 : index
    %33 = vector.load %arg8[%c0_26, %c1, %c0_27, %c0_28] : memref<1x4x32x32xf32, #tpu.memory_space<vmem>>, vector<1x1x32x32xf32>
    %34 = vector.shape_cast %33 : vector<1x1x32x32xf32> to vector<32x32xf32>
    %35 = vector.shape_cast %32 : vector<32x32xf32> to vector<1x1x32x32xf32>
    tpu.vector_store %arg8[%c0_26, %c1, %c0_27, %c0_28], %35 {strides = array<i32>} : memref<1x4x32x32xf32, #tpu.memory_space<vmem>>, vector<1x1x32x32xf32>,
    %36 = vector.extract_strided_slice %20 {offsets = [0, 64], sizes = [32, 32], strides = [1, 1]} : vector<32x128xf32> to vector<32x32xf32>
    %37 = vector.extract_strided_slice %21 {offsets = [2, 0], sizes = [1, 1], strides = [1, 1]} : vector<4x1xf32> to vector<1x1xf32>
    %38 = vector.broadcast %37 : vector<1x1xf32> to vector<32x32xf32>
    %39 = arith.addf %36, %38 : vector<32x32xf32>
    %c0_29 = arith.constant 0 : index
    %c2 = arith.constant 2 : index
    %c0_30 = arith.constant 0 : index
    %c0_31 = arith.constant 0 : index
    %40 = vector.load %arg8[%c0_29, %c2, %c0_30, %c0_31] : memref<1x4x32x32xf32, #tpu.memory_space<vmem>>, vector<1x1x32x32xf32>
    %41 = vector.shape_cast %40 : vector<1x1x32x32xf32> to vector<32x32xf32>
    %42 = vector.shape_cast %39 : vector<32x32xf32> to vector<1x1x32x32xf32>
    tpu.vector_store %arg8[%c0_29, %c2, %c0_30, %c0_31], %42 {strides = array<i32>} : memref<1x4x32x32xf32, #tpu.memory_space<vmem>>, vector<1x1x32x32xf32>,
    %43 = vector.extract_strided_slice %20 {offsets = [0, 96], sizes = [32, 32], strides = [1, 1]} : vector<32x128xf32> to vector<32x32xf32>
    %44 = vector.extract_strided_slice %21 {offsets = [3, 0], sizes = [1, 1], strides = [1, 1]} : vector<4x1xf32> to vector<1x1xf32>
    %45 = vector.broadcast %44 : vector<1x1xf32> to vector<32x32xf32>
    %46 = arith.addf %43, %45 : vector<32x32xf32>
    %c0_32 = arith.constant 0 : index
    %c3 = arith.constant 3 : index
    %c0_33 = arith.constant 0 : index
    %c0_34 = arith.constant 0 : index
    %47 = vector.load %arg8[%c0_32, %c3, %c0_33, %c0_34] : memref<1x4x32x32xf32, #tpu.memory_space<vmem>>, vector<1x1x32x32xf32>
    %48 = vector.shape_cast %47 : vector<1x1x32x32xf32> to vector<32x32xf32>
    %49 = vector.shape_cast %46 : vector<32x32xf32> to vector<1x1x32x32xf32>
    tpu.vector_store %arg8[%c0_32, %c3, %c0_33, %c0_34], %49 {strides = array<i32>} : memref<1x4x32x32xf32, #tpu.memory_space<vmem>>, vector<1x1x32x32xf32>,
    return
  }
  func.func @transform_0(%arg0: i32, %arg1: i32) -> (i32, i32, i32) {
    %c0_i32 = arith.constant 0 : i32
    %c0_i32_0 = arith.constant 0 : i32
    %c0_i32_1 = arith.constant 0 : i32
    return %arg0, %c0_i32, %c0_i32_0 : i32, i32, i32
  }
  func.func @transform_1(%arg0: i32, %arg1: i32) -> (i32, i32, i32) {
    %c0_i32 = arith.constant 0 : i32
    %c0_i32_0 = arith.constant 0 : i32
    %c0_i32_1 = arith.constant 0 : i32
    return %arg0, %c0_i32, %c0_i32_0 : i32, i32, i32
  }
  func.func @transform_2(%arg0: i32, %arg1: i32) -> (i32, i32) {
    %c0_i32 = arith.constant 0 : i32
    %c0_i32_0 = arith.constant 0 : i32
    return %arg1, %c0_i32 : i32, i32
  }
  func.func @transform_3(%arg0: i32, %arg1: i32) -> (i32, i32) {
    %c0_i32 = arith.constant 0 : i32
    %c0_i32_0 = arith.constant 0 : i32
    return %arg1, %c0_i32 : i32, i32
  }
  func.func @transform_4(%arg0: i32, %arg1: i32) -> (i32, i32) {
    %c0_i32 = arith.constant 0 : i32
    %c0_i32_0 = arith.constant 0 : i32
    %c0_i32_1 = arith.constant 0 : i32
    return %c0_i32, %c0_i32_0 : i32, i32
  }
  func.func @transform_5(%arg0: i32, %arg1: i32) -> (i32, i32) {
    %c0_i32 = arith.constant 0 : i32
    %c0_i32_0 = arith.constant 0 : i32
    %c0_i32_1 = arith.constant 0 : i32
    return %c0_i32, %c0_i32_0 : i32, i32
  }
  func.func @transform_6(%arg0: i32, %arg1: i32) -> (i32, i32, i32, i32) {
    %c0_i32 = arith.constant 0 : i32
    %c0_i32_0 = arith.constant 0 : i32
    %c0_i32_1 = arith.constant 0 : i32
    return %arg0, %arg1, %c0_i32, %c0_i32_0 : i32, i32, i32, i32
  }
}

module attributes {stable_mosaic.version = 11 : i64} {
  func.func @kernel(%arg0: i32, %arg1: i32, %arg2: memref<1x4x256xf32, #tpu.memory_space<vmem>>, %arg3: memref<1x4x256xf32, #tpu.memory_space<vmem>>, %arg4: memref<4x4xf32, #tpu.memory_space<vmem>>, %arg5: memref<4x1xf32, #tpu.memory_space<vmem>>, %arg6: memref<16x32xf32, #tpu.memory_space<vmem>>, %arg7: memref<32x16xf32, #tpu.memory_space<vmem>>, %arg8: memref<1x4x32x32xf32, #tpu.memory_space<vmem>>, %arg9: memref<16x128xf32, #tpu.memory_space<vmem>>, %arg10: memref<4x16x32xf32, #tpu.memory_space<vmem>>) attributes {dimension_semantics = [#tpu.dimension_semantics<parallel>, #tpu.dimension_semantics<parallel>], iteration_bounds = array<i64: 2, 1>, scalar_prefetch = 0 : i64, scratch_operands = 2 : i64, tpu.core_type = #tpu.core_type<tc>, window_params = [{transform_indices = @transform_0, window_bounds = array<i64: 1, 4, 256>}, {transform_indices = @transform_1, window_bounds = array<i64: 1, 4, 256>}, {transform_indices = @transform_2, window_bounds = array<i64: 4, 4>}, {transform_indices = @transform_3, window_bounds = array<i64: 4, 1>}, {pipeline_mode = #tpu.pipeline_mode<synchronous>, transform_indices = @transform_4, window_bounds = array<i64: 16, 32>}, {pipeline_mode = #tpu.pipeline_mode<synchronous>, transform_indices = @transform_5, window_bounds = array<i64: 32, 16>}, {transform_indices = @transform_6, window_bounds = array<i64: 1, 4, 32, 32>}]} {
    %c0 = arith.constant 0 : index
    %c0_0 = arith.constant 0 : index
    %c0_1 = arith.constant 0 : index
    %0 = vector.load %arg2[%c0, %c0_0, %c0_1] : memref<1x4x256xf32, #tpu.memory_space<vmem>>, vector<1x4x256xf32>
    %1 = vector.shape_cast %0 : vector<1x4x256xf32> to vector<4x256xf32>
    %c0_2 = arith.constant 0 : index
    %c0_3 = arith.constant 0 : index
    %c0_4 = arith.constant 0 : index
    %2 = vector.load %arg3[%c0_2, %c0_3, %c0_4] : memref<1x4x256xf32, #tpu.memory_space<vmem>>, vector<1x4x256xf32>
    %3 = vector.shape_cast %2 : vector<1x4x256xf32> to vector<4x256xf32>
    %4 = arith.addf %1, %3 : vector<4x256xf32>
    %c0_5 = arith.constant 0 : index
    %c0_6 = arith.constant 0 : index
    %5 = vector.load %arg4[%c0_5, %c0_6] : memref<4x4xf32, #tpu.memory_space<vmem>>, vector<4x4xf32>
    %cst = arith.constant dense<0.000000e+00> : vector<4x256xf32>
    %6 = tpu.matmul %5, %4, %cst {dimension_numbers = #tpu.dot_dimension_numbers<[1], [0], [0], [1], [0, 0, 1, 1], [], []>} : vector<4x4xf32>, vector<4x256xf32>, vector<4x256xf32> -> vector<4x256xf32>
    %7 = vector.extract_strided_slice %6 {offsets = [0, 0], sizes = [4, 16], strides = [1, 1]} : vector<4x256xf32> to vector<4x16xf32>
    %c0_7 = arith.constant 0 : index
    %c0_8 = arith.constant 0 : index
    %8 = vector.load %arg6[%c0_7, %c0_8] : memref<16x32xf32, #tpu.memory_space<vmem>>, vector<16x32xf32>
    %cst_9 = arith.constant dense<0.000000e+00> : vector<4x32xf32>
    %9 = tpu.matmul %7, %8, %cst_9 {dimension_numbers = #tpu.dot_dimension_numbers<[1], [0], [0], [1], [0, 0, 1, 1], [], []>} : vector<4x16xf32>, vector<16x32xf32>, vector<4x32xf32> -> vector<4x32xf32>
    %c0_10 = arith.constant 0 : index
    %c0_11 = arith.constant 0 : index
    %c0_12 = arith.constant 0 : index
    %10 = vector.load %arg10[%c0_10, %c0_11, %c0_12] : memref<4x16x32xf32, #tpu.memory_space<vmem>>, vector<4x1x32xf32>
    %11 = vector.shape_cast %10 : vector<4x1x32xf32> to vector<4x32xf32>
    %12 = vector.shape_cast %9 : vector<4x32xf32> to vector<4x1x32xf32>
    tpu.vector_store %arg10[%c0_10, %c0_11, %c0_12], %12 {strides = array<i32>} : memref<4x16x32xf32, #tpu.memory_space<vmem>>, vector<4x1x32xf32>,
    %13 = vector.extract_strided_slice %6 {offsets = [0, 16], sizes = [4, 16], strides = [1, 1]} : vector<4x256xf32> to vector<4x16xf32>
    %c0_13 = arith.constant 0 : index
    %c0_14 = arith.constant 0 : index
    %14 = vector.load %arg6[%c0_13, %c0_14] : memref<16x32xf32, #tpu.memory_space<vmem>>, vector<16x32xf32>
    %cst_15 = arith.constant dense<0.000000e+00> : vector<4x32xf32>
    %15 = tpu.matmul %13, %14, %cst_15 {dimension_numbers = #tpu.dot_dimension_numbers<[1], [0], [0], [1], [0, 0, 1, 1], [], []>} : vector<4x16xf32>, vector<16x32xf32>, vector<4x32xf32> -> vector<4x32xf32>
    %c0_16 = arith.constant 0 : index
    %c1 = arith.constant 1 : index
    %c0_17 = arith.constant 0 : index
    %16 = vector.load %arg10[%c0_16, %c1, %c0_17] : memref<4x16x32xf32, #tpu.memory_space<vmem>>, vector<4x1x32xf32>
    %17 = vector.shape_cast %16 : vector<4x1x32xf32> to vector<4x32xf32>
    %18 = vector.shape_cast %15 : vector<4x32xf32> to vector<4x1x32xf32>
    tpu.vector_store %arg10[%c0_16, %c1, %c0_17], %18 {strides = array<i32>} : memref<4x16x32xf32, #tpu.memory_space<vmem>>, vector<4x1x32xf32>,
    %19 = vector.extract_strided_slice %6 {offsets = [0, 32], sizes = [4, 16], strides = [1, 1]} : vector<4x256xf32> to vector<4x16xf32>
    %c0_18 = arith.constant 0 : index
    %c0_19 = arith.constant 0 : index
    %20 = vector.load %arg6[%c0_18, %c0_19] : memref<16x32xf32, #tpu.memory_space<vmem>>, vector<16x32xf32>
    %cst_20 = arith.constant dense<0.000000e+00> : vector<4x32xf32>
    %21 = tpu.matmul %19, %20, %cst_20 {dimension_numbers = #tpu.dot_dimension_numbers<[1], [0], [0], [1], [0, 0, 1, 1], [], []>} : vector<4x16xf32>, vector<16x32xf32>, vector<4x32xf32> -> vector<4x32xf32>
    %c0_21 = arith.constant 0 : index
    %c2 = arith.constant 2 : index
    %c0_22 = arith.constant 0 : index
    %22 = vector.load %arg10[%c0_21, %c2, %c0_22] : memref<4x16x32xf32, #tpu.memory_space<vmem>>, vector<4x1x32xf32>
    %23 = vector.shape_cast %22 : vector<4x1x32xf32> to vector<4x32xf32>
    %24 = vector.shape_cast %21 : vector<4x32xf32> to vector<4x1x32xf32>
    tpu.vector_store %arg10[%c0_21, %c2, %c0_22], %24 {strides = array<i32>} : memref<4x16x32xf32, #tpu.memory_space<vmem>>, vector<4x1x32xf32>,
    %25 = vector.extract_strided_slice %6 {offsets = [0, 48], sizes = [4, 16], strides = [1, 1]} : vector<4x256xf32> to vector<4x16xf32>
    %c0_23 = arith.constant 0 : index
    %c0_24 = arith.constant 0 : index
    %26 = vector.load %arg6[%c0_23, %c0_24] : memref<16x32xf32, #tpu.memory_space<vmem>>, vector<16x32xf32>
    %cst_25 = arith.constant dense<0.000000e+00> : vector<4x32xf32>
    %27 = tpu.matmul %25, %26, %cst_25 {dimension_numbers = #tpu.dot_dimension_numbers<[1], [0], [0], [1], [0, 0, 1, 1], [], []>} : vector<4x16xf32>, vector<16x32xf32>, vector<4x32xf32> -> vector<4x32xf32>
    %c0_26 = arith.constant 0 : index
    %c3 = arith.constant 3 : index
    %c0_27 = arith.constant 0 : index
    %28 = vector.load %arg10[%c0_26, %c3, %c0_27] : memref<4x16x32xf32, #tpu.memory_space<vmem>>, vector<4x1x32xf32>
    %29 = vector.shape_cast %28 : vector<4x1x32xf32> to vector<4x32xf32>
    %30 = vector.shape_cast %27 : vector<4x32xf32> to vector<4x1x32xf32>
    tpu.vector_store %arg10[%c0_26, %c3, %c0_27], %30 {strides = array<i32>} : memref<4x16x32xf32, #tpu.memory_space<vmem>>, vector<4x1x32xf32>,
    %31 = vector.extract_strided_slice %6 {offsets = [0, 64], sizes = [4, 16], strides = [1, 1]} : vector<4x256xf32> to vector<4x16xf32>
    %c0_28 = arith.constant 0 : index
    %c0_29 = arith.constant 0 : index
    %32 = vector.load %arg6[%c0_28, %c0_29] : memref<16x32xf32, #tpu.memory_space<vmem>>, vector<16x32xf32>
    %cst_30 = arith.constant dense<0.000000e+00> : vector<4x32xf32>
    %33 = tpu.matmul %31, %32, %cst_30 {dimension_numbers = #tpu.dot_dimension_numbers<[1], [0], [0], [1], [0, 0, 1, 1], [], []>} : vector<4x16xf32>, vector<16x32xf32>, vector<4x32xf32> -> vector<4x32xf32>
    %c0_31 = arith.constant 0 : index
    %c4 = arith.constant 4 : index
    %c0_32 = arith.constant 0 : index
    %34 = vector.load %arg10[%c0_31, %c4, %c0_32] : memref<4x16x32xf32, #tpu.memory_space<vmem>>, vector<4x1x32xf32>
    %35 = vector.shape_cast %34 : vector<4x1x32xf32> to vector<4x32xf32>
    %36 = vector.shape_cast %33 : vector<4x32xf32> to vector<4x1x32xf32>
    tpu.vector_store %arg10[%c0_31, %c4, %c0_32], %36 {strides = array<i32>} : memref<4x16x32xf32, #tpu.memory_space<vmem>>, vector<4x1x32xf32>,
    %37 = vector.extract_strided_slice %6 {offsets = [0, 80], sizes = [4, 16], strides = [1, 1]} : vector<4x256xf32> to vector<4x16xf32>
    %c0_33 = arith.constant 0 : index
    %c0_34 = arith.constant 0 : index
    %38 = vector.load %arg6[%c0_33, %c0_34] : memref<16x32xf32, #tpu.memory_space<vmem>>, vector<16x32xf32>
    %cst_35 = arith.constant dense<0.000000e+00> : vector<4x32xf32>
    %39 = tpu.matmul %37, %38, %cst_35 {dimension_numbers = #tpu.dot_dimension_numbers<[1], [0], [0], [1], [0, 0, 1, 1], [], []>} : vector<4x16xf32>, vector<16x32xf32>, vector<4x32xf32> -> vector<4x32xf32>
    %c0_36 = arith.constant 0 : index
    %c5 = arith.constant 5 : index
    %c0_37 = arith.constant 0 : index
    %40 = vector.load %arg10[%c0_36, %c5, %c0_37] : memref<4x16x32xf32, #tpu.memory_space<vmem>>, vector<4x1x32xf32>
    %41 = vector.shape_cast %40 : vector<4x1x32xf32> to vector<4x32xf32>
    %42 = vector.shape_cast %39 : vector<4x32xf32> to vector<4x1x32xf32>
    tpu.vector_store %arg10[%c0_36, %c5, %c0_37], %42 {strides = array<i32>} : memref<4x16x32xf32, #tpu.memory_space<vmem>>, vector<4x1x32xf32>,
    %43 = vector.extract_strided_slice %6 {offsets = [0, 96], sizes = [4, 16], strides = [1, 1]} : vector<4x256xf32> to vector<4x16xf32>
    %c0_38 = arith.constant 0 : index
    %c0_39 = arith.constant 0 : index
    %44 = vector.load %arg6[%c0_38, %c0_39] : memref<16x32xf32, #tpu.memory_space<vmem>>, vector<16x32xf32>
    %cst_40 = arith.constant dense<0.000000e+00> : vector<4x32xf32>
    %45 = tpu.matmul %43, %44, %cst_40 {dimension_numbers = #tpu.dot_dimension_numbers<[1], [0], [0], [1], [0, 0, 1, 1], [], []>} : vector<4x16xf32>, vector<16x32xf32>, vector<4x32xf32> -> vector<4x32xf32>
    %c0_41 = arith.constant 0 : index
    %c6 = arith.constant 6 : index
    %c0_42 = arith.constant 0 : index
    %46 = vector.load %arg10[%c0_41, %c6, %c0_42] : memref<4x16x32xf32, #tpu.memory_space<vmem>>, vector<4x1x32xf32>
    %47 = vector.shape_cast %46 : vector<4x1x32xf32> to vector<4x32xf32>
    %48 = vector.shape_cast %45 : vector<4x32xf32> to vector<4x1x32xf32>
    tpu.vector_store %arg10[%c0_41, %c6, %c0_42], %48 {strides = array<i32>} : memref<4x16x32xf32, #tpu.memory_space<vmem>>, vector<4x1x32xf32>,
    %49 = vector.extract_strided_slice %6 {offsets = [0, 112], sizes = [4, 16], strides = [1, 1]} : vector<4x256xf32> to vector<4x16xf32>
    %c0_43 = arith.constant 0 : index
    %c0_44 = arith.constant 0 : index
    %50 = vector.load %arg6[%c0_43, %c0_44] : memref<16x32xf32, #tpu.memory_space<vmem>>, vector<16x32xf32>
    %cst_45 = arith.constant dense<0.000000e+00> : vector<4x32xf32>
    %51 = tpu.matmul %49, %50, %cst_45 {dimension_numbers = #tpu.dot_dimension_numbers<[1], [0], [0], [1], [0, 0, 1, 1], [], []>} : vector<4x16xf32>, vector<16x32xf32>, vector<4x32xf32> -> vector<4x32xf32>
    %c0_46 = arith.constant 0 : index
    %c7 = arith.constant 7 : index
    %c0_47 = arith.constant 0 : index
    %52 = vector.load %arg10[%c0_46, %c7, %c0_47] : memref<4x16x32xf32, #tpu.memory_space<vmem>>, vector<4x1x32xf32>
    %53 = vector.shape_cast %52 : vector<4x1x32xf32> to vector<4x32xf32>
    %54 = vector.shape_cast %51 : vector<4x32xf32> to vector<4x1x32xf32>
    tpu.vector_store %arg10[%c0_46, %c7, %c0_47], %54 {strides = array<i32>} : memref<4x16x32xf32, #tpu.memory_space<vmem>>, vector<4x1x32xf32>,
    %55 = vector.extract_strided_slice %6 {offsets = [0, 128], sizes = [4, 16], strides = [1, 1]} : vector<4x256xf32> to vector<4x16xf32>
    %c0_48 = arith.constant 0 : index
    %c0_49 = arith.constant 0 : index
    %56 = vector.load %arg6[%c0_48, %c0_49] : memref<16x32xf32, #tpu.memory_space<vmem>>, vector<16x32xf32>
    %cst_50 = arith.constant dense<0.000000e+00> : vector<4x32xf32>
    %57 = tpu.matmul %55, %56, %cst_50 {dimension_numbers = #tpu.dot_dimension_numbers<[1], [0], [0], [1], [0, 0, 1, 1], [], []>} : vector<4x16xf32>, vector<16x32xf32>, vector<4x32xf32> -> vector<4x32xf32>
    %c0_51 = arith.constant 0 : index
    %c8 = arith.constant 8 : index
    %c0_52 = arith.constant 0 : index
    %58 = vector.load %arg10[%c0_51, %c8, %c0_52] : memref<4x16x32xf32, #tpu.memory_space<vmem>>, vector<4x1x32xf32>
    %59 = vector.shape_cast %58 : vector<4x1x32xf32> to vector<4x32xf32>
    %60 = vector.shape_cast %57 : vector<4x32xf32> to vector<4x1x32xf32>
    tpu.vector_store %arg10[%c0_51, %c8, %c0_52], %60 {strides = array<i32>} : memref<4x16x32xf32, #tpu.memory_space<vmem>>, vector<4x1x32xf32>,
    %61 = vector.extract_strided_slice %6 {offsets = [0, 144], sizes = [4, 16], strides = [1, 1]} : vector<4x256xf32> to vector<4x16xf32>
    %c0_53 = arith.constant 0 : index
    %c0_54 = arith.constant 0 : index
    %62 = vector.load %arg6[%c0_53, %c0_54] : memref<16x32xf32, #tpu.memory_space<vmem>>, vector<16x32xf32>
    %cst_55 = arith.constant dense<0.000000e+00> : vector<4x32xf32>
    %63 = tpu.matmul %61, %62, %cst_55 {dimension_numbers = #tpu.dot_dimension_numbers<[1], [0], [0], [1], [0, 0, 1, 1], [], []>} : vector<4x16xf32>, vector<16x32xf32>, vector<4x32xf32> -> vector<4x32xf32>
    %c0_56 = arith.constant 0 : index
    %c9 = arith.constant 9 : index
    %c0_57 = arith.constant 0 : index
    %64 = vector.load %arg10[%c0_56, %c9, %c0_57] : memref<4x16x32xf32, #tpu.memory_space<vmem>>, vector<4x1x32xf32>
    %65 = vector.shape_cast %64 : vector<4x1x32xf32> to vector<4x32xf32>
    %66 = vector.shape_cast %63 : vector<4x32xf32> to vector<4x1x32xf32>
    tpu.vector_store %arg10[%c0_56, %c9, %c0_57], %66 {strides = array<i32>} : memref<4x16x32xf32, #tpu.memory_space<vmem>>, vector<4x1x32xf32>,
    %67 = vector.extract_strided_slice %6 {offsets = [0, 160], sizes = [4, 16], strides = [1, 1]} : vector<4x256xf32> to vector<4x16xf32>
    %c0_58 = arith.constant 0 : index
    %c0_59 = arith.constant 0 : index
    %68 = vector.load %arg6[%c0_58, %c0_59] : memref<16x32xf32, #tpu.memory_space<vmem>>, vector<16x32xf32>
    %cst_60 = arith.constant dense<0.000000e+00> : vector<4x32xf32>
    %69 = tpu.matmul %67, %68, %cst_60 {dimension_numbers = #tpu.dot_dimension_numbers<[1], [0], [0], [1], [0, 0, 1, 1], [], []>} : vector<4x16xf32>, vector<16x32xf32>, vector<4x32xf32> -> vector<4x32xf32>
    %c0_61 = arith.constant 0 : index
    %c10 = arith.constant 10 : index
    %c0_62 = arith.constant 0 : index
    %70 = vector.load %arg10[%c0_61, %c10, %c0_62] : memref<4x16x32xf32, #tpu.memory_space<vmem>>, vector<4x1x32xf32>
    %71 = vector.shape_cast %70 : vector<4x1x32xf32> to vector<4x32xf32>
    %72 = vector.shape_cast %69 : vector<4x32xf32> to vector<4x1x32xf32>
    tpu.vector_store %arg10[%c0_61, %c10, %c0_62], %72 {strides = array<i32>} : memref<4x16x32xf32, #tpu.memory_space<vmem>>, vector<4x1x32xf32>,
    %73 = vector.extract_strided_slice %6 {offsets = [0, 176], sizes = [4, 16], strides = [1, 1]} : vector<4x256xf32> to vector<4x16xf32>
    %c0_63 = arith.constant 0 : index
    %c0_64 = arith.constant 0 : index
    %74 = vector.load %arg6[%c0_63, %c0_64] : memref<16x32xf32, #tpu.memory_space<vmem>>, vector<16x32xf32>
    %cst_65 = arith.constant dense<0.000000e+00> : vector<4x32xf32>
    %75 = tpu.matmul %73, %74, %cst_65 {dimension_numbers = #tpu.dot_dimension_numbers<[1], [0], [0], [1], [0, 0, 1, 1], [], []>} : vector<4x16xf32>, vector<16x32xf32>, vector<4x32xf32> -> vector<4x32xf32>
    %c0_66 = arith.constant 0 : index
    %c11 = arith.constant 11 : index
    %c0_67 = arith.constant 0 : index
    %76 = vector.load %arg10[%c0_66, %c11, %c0_67] : memref<4x16x32xf32, #tpu.memory_space<vmem>>, vector<4x1x32xf32>
    %77 = vector.shape_cast %76 : vector<4x1x32xf32> to vector<4x32xf32>
    %78 = vector.shape_cast %75 : vector<4x32xf32> to vector<4x1x32xf32>
    tpu.vector_store %arg10[%c0_66, %c11, %c0_67], %78 {strides = array<i32>} : memref<4x16x32xf32, #tpu.memory_space<vmem>>, vector<4x1x32xf32>,
    %79 = vector.extract_strided_slice %6 {offsets = [0, 192], sizes = [4, 16], strides = [1, 1]} : vector<4x256xf32> to vector<4x16xf32>
    %c0_68 = arith.constant 0 : index
    %c0_69 = arith.constant 0 : index
    %80 = vector.load %arg6[%c0_68, %c0_69] : memref<16x32xf32, #tpu.memory_space<vmem>>, vector<16x32xf32>
    %cst_70 = arith.constant dense<0.000000e+00> : vector<4x32xf32>
    %81 = tpu.matmul %79, %80, %cst_70 {dimension_numbers = #tpu.dot_dimension_numbers<[1], [0], [0], [1], [0, 0, 1, 1], [], []>} : vector<4x16xf32>, vector<16x32xf32>, vector<4x32xf32> -> vector<4x32xf32>
    %c0_71 = arith.constant 0 : index
    %c12 = arith.constant 12 : index
    %c0_72 = arith.constant 0 : index
    %82 = vector.load %arg10[%c0_71, %c12, %c0_72] : memref<4x16x32xf32, #tpu.memory_space<vmem>>, vector<4x1x32xf32>
    %83 = vector.shape_cast %82 : vector<4x1x32xf32> to vector<4x32xf32>
    %84 = vector.shape_cast %81 : vector<4x32xf32> to vector<4x1x32xf32>
    tpu.vector_store %arg10[%c0_71, %c12, %c0_72], %84 {strides = array<i32>} : memref<4x16x32xf32, #tpu.memory_space<vmem>>, vector<4x1x32xf32>,
    %85 = vector.extract_strided_slice %6 {offsets = [0, 208], sizes = [4, 16], strides = [1, 1]} : vector<4x256xf32> to vector<4x16xf32>
    %c0_73 = arith.constant 0 : index
    %c0_74 = arith.constant 0 : index
    %86 = vector.load %arg6[%c0_73, %c0_74] : memref<16x32xf32, #tpu.memory_space<vmem>>, vector<16x32xf32>
    %cst_75 = arith.constant dense<0.000000e+00> : vector<4x32xf32>
    %87 = tpu.matmul %85, %86, %cst_75 {dimension_numbers = #tpu.dot_dimension_numbers<[1], [0], [0], [1], [0, 0, 1, 1], [], []>} : vector<4x16xf32>, vector<16x32xf32>, vector<4x32xf32> -> vector<4x32xf32>
    %c0_76 = arith.constant 0 : index
    %c13 = arith.constant 13 : index
    %c0_77 = arith.constant 0 : index
    %88 = vector.load %arg10[%c0_76, %c13, %c0_77] : memref<4x16x32xf32, #tpu.memory_space<vmem>>, vector<4x1x32xf32>
    %89 = vector.shape_cast %88 : vector<4x1x32xf32> to vector<4x32xf32>
    %90 = vector.shape_cast %87 : vector<4x32xf32> to vector<4x1x32xf32>
    tpu.vector_store %arg10[%c0_76, %c13, %c0_77], %90 {strides = array<i32>} : memref<4x16x32xf32, #tpu.memory_space<vmem>>, vector<4x1x32xf32>,
    %91 = vector.extract_strided_slice %6 {offsets = [0, 224], sizes = [4, 16], strides = [1, 1]} : vector<4x256xf32> to vector<4x16xf32>
    %c0_78 = arith.constant 0 : index
    %c0_79 = arith.constant 0 : index
    %92 = vector.load %arg6[%c0_78, %c0_79] : memref<16x32xf32, #tpu.memory_space<vmem>>, vector<16x32xf32>
    %cst_80 = arith.constant dense<0.000000e+00> : vector<4x32xf32>
    %93 = tpu.matmul %91, %92, %cst_80 {dimension_numbers = #tpu.dot_dimension_numbers<[1], [0], [0], [1], [0, 0, 1, 1], [], []>} : vector<4x16xf32>, vector<16x32xf32>, vector<4x32xf32> -> vector<4x32xf32>
    %c0_81 = arith.constant 0 : index
    %c14 = arith.constant 14 : index
    %c0_82 = arith.constant 0 : index
    %94 = vector.load %arg10[%c0_81, %c14, %c0_82] : memref<4x16x32xf32, #tpu.memory_space<vmem>>, vector<4x1x32xf32>
    %95 = vector.shape_cast %94 : vector<4x1x32xf32> to vector<4x32xf32>
    %96 = vector.shape_cast %93 : vector<4x32xf32> to vector<4x1x32xf32>
    tpu.vector_store %arg10[%c0_81, %c14, %c0_82], %96 {strides = array<i32>} : memref<4x16x32xf32, #tpu.memory_space<vmem>>, vector<4x1x32xf32>,
    %97 = vector.extract_strided_slice %6 {offsets = [0, 240], sizes = [4, 16], strides = [1, 1]} : vector<4x256xf32> to vector<4x16xf32>
    %c0_83 = arith.constant 0 : index
    %c0_84 = arith.constant 0 : index
    %98 = vector.load %arg6[%c0_83, %c0_84] : memref<16x32xf32, #tpu.memory_space<vmem>>, vector<16x32xf32>
    %cst_85 = arith.constant dense<0.000000e+00> : vector<4x32xf32>
    %99 = tpu.matmul %97, %98, %cst_85 {dimension_numbers = #tpu.dot_dimension_numbers<[1], [0], [0], [1], [0, 0, 1, 1], [], []>} : vector<4x16xf32>, vector<16x32xf32>, vector<4x32xf32> -> vector<4x32xf32>
    %c0_86 = arith.constant 0 : index
    %c15 = arith.constant 15 : index
    %c0_87 = arith.constant 0 : index
    %100 = vector.load %arg10[%c0_86, %c15, %c0_87] : memref<4x16x32xf32, #tpu.memory_space<vmem>>, vector<4x1x32xf32>
    %101 = vector.shape_cast %100 : vector<4x1x32xf32> to vector<4x32xf32>
    %102 = vector.shape_cast %99 : vector<4x32xf32> to vector<4x1x32xf32>
    tpu.vector_store %arg10[%c0_86, %c15, %c0_87], %102 {strides = array<i32>} : memref<4x16x32xf32, #tpu.memory_space<vmem>>, vector<4x1x32xf32>,
    %c0_88 = arith.constant 0 : index
    %c0_89 = arith.constant 0 : index
    %c0_90 = arith.constant 0 : index
    %103 = vector.load %arg10[%c0_88, %c0_89, %c0_90] : memref<4x16x32xf32, #tpu.memory_space<vmem>>, vector<4x16x32xf32>
    %104 = vector.extract_strided_slice %103 {offsets = [0, 0, 0], sizes = [1, 16, 32], strides = [1, 1, 1]} : vector<4x16x32xf32> to vector<1x16x32xf32>
    %105 = vector.shape_cast %104 : vector<1x16x32xf32> to vector<16x32xf32>
    %c0_91 = arith.constant 0 : index
    %c0_92 = arith.constant 0 : index
    %106 = vector.load %arg9[%c0_91, %c0_92] : memref<16x128xf32, #tpu.memory_space<vmem>>, vector<16x32xf32>
    tpu.vector_store %arg9[%c0_91, %c0_92], %105 {strides = array<i32>} : memref<16x128xf32, #tpu.memory_space<vmem>>, vector<16x32xf32>,
    %107 = vector.extract_strided_slice %103 {offsets = [1, 0, 0], sizes = [1, 16, 32], strides = [1, 1, 1]} : vector<4x16x32xf32> to vector<1x16x32xf32>
    %108 = vector.shape_cast %107 : vector<1x16x32xf32> to vector<16x32xf32>
    %c0_93 = arith.constant 0 : index
    %c32 = arith.constant 32 : index
    %109 = vector.load %arg9[%c0_93, %c32] : memref<16x128xf32, #tpu.memory_space<vmem>>, vector<16x32xf32>
    tpu.vector_store %arg9[%c0_93, %c32], %108 {strides = array<i32>} : memref<16x128xf32, #tpu.memory_space<vmem>>, vector<16x32xf32>,
    %110 = vector.extract_strided_slice %103 {offsets = [2, 0, 0], sizes = [1, 16, 32], strides = [1, 1, 1]} : vector<4x16x32xf32> to vector<1x16x32xf32>
    %111 = vector.shape_cast %110 : vector<1x16x32xf32> to vector<16x32xf32>
    %c0_94 = arith.constant 0 : index
    %c64 = arith.constant 64 : index
    %112 = vector.load %arg9[%c0_94, %c64] : memref<16x128xf32, #tpu.memory_space<vmem>>, vector<16x32xf32>
    tpu.vector_store %arg9[%c0_94, %c64], %111 {strides = array<i32>} : memref<16x128xf32, #tpu.memory_space<vmem>>, vector<16x32xf32>,
    %113 = vector.extract_strided_slice %103 {offsets = [3, 0, 0], sizes = [1, 16, 32], strides = [1, 1, 1]} : vector<4x16x32xf32> to vector<1x16x32xf32>
    %114 = vector.shape_cast %113 : vector<1x16x32xf32> to vector<16x32xf32>
    %c0_95 = arith.constant 0 : index
    %c96 = arith.constant 96 : index
    %115 = vector.load %arg9[%c0_95, %c96] : memref<16x128xf32, #tpu.memory_space<vmem>>, vector<16x32xf32>
    tpu.vector_store %arg9[%c0_95, %c96], %114 {strides = array<i32>} : memref<16x128xf32, #tpu.memory_space<vmem>>, vector<16x32xf32>,
    %c0_96 = arith.constant 0 : index
    %c0_97 = arith.constant 0 : index
    %116 = vector.load %arg7[%c0_96, %c0_97] : memref<32x16xf32, #tpu.memory_space<vmem>>, vector<32x16xf32>
    %c0_98 = arith.constant 0 : index
    %c0_99 = arith.constant 0 : index
    %117 = vector.load %arg9[%c0_98, %c0_99] : memref<16x128xf32, #tpu.memory_space<vmem>>, vector<16x128xf32>
    %cst_100 = arith.constant dense<0.000000e+00> : vector<32x128xf32>
    %118 = tpu.matmul %116, %117, %cst_100 {dimension_numbers = #tpu.dot_dimension_numbers<[1], [0], [0], [1], [0, 0, 1, 1], [], []>} : vector<32x16xf32>, vector<16x128xf32>, vector<32x128xf32> -> vector<32x128xf32>
    %c0_101 = arith.constant 0 : index
    %c0_102 = arith.constant 0 : index
    %119 = vector.load %arg5[%c0_101, %c0_102] : memref<4x1xf32, #tpu.memory_space<vmem>>, vector<4x1xf32>
    %120 = vector.extract_strided_slice %118 {offsets = [0, 0], sizes = [32, 32], strides = [1, 1]} : vector<32x128xf32> to vector<32x32xf32>
    %121 = vector.extract_strided_slice %119 {offsets = [0, 0], sizes = [1, 1], strides = [1, 1]} : vector<4x1xf32> to vector<1x1xf32>
    %122 = vector.broadcast %121 : vector<1x1xf32> to vector<32x32xf32>
    %123 = arith.addf %120, %122 : vector<32x32xf32>
    %c0_103 = arith.constant 0 : index
    %c0_104 = arith.constant 0 : index
    %c0_105 = arith.constant 0 : index
    %c0_106 = arith.constant 0 : index
    %124 = vector.load %arg8[%c0_103, %c0_104, %c0_105, %c0_106] : memref<1x4x32x32xf32, #tpu.memory_space<vmem>>, vector<1x1x32x32xf32>
    %125 = vector.shape_cast %124 : vector<1x1x32x32xf32> to vector<32x32xf32>
    %126 = vector.shape_cast %123 : vector<32x32xf32> to vector<1x1x32x32xf32>
    tpu.vector_store %arg8[%c0_103, %c0_104, %c0_105, %c0_106], %126 {strides = array<i32>} : memref<1x4x32x32xf32, #tpu.memory_space<vmem>>, vector<1x1x32x32xf32>,
    %127 = vector.extract_strided_slice %118 {offsets = [0, 32], sizes = [32, 32], strides = [1, 1]} : vector<32x128xf32> to vector<32x32xf32>
    %128 = vector.extract_strided_slice %119 {offsets = [1, 0], sizes = [1, 1], strides = [1, 1]} : vector<4x1xf32> to vector<1x1xf32>
    %129 = vector.broadcast %128 : vector<1x1xf32> to vector<32x32xf32>
    %130 = arith.addf %127, %129 : vector<32x32xf32>
    %c0_107 = arith.constant 0 : index
    %c1_108 = arith.constant 1 : index
    %c0_109 = arith.constant 0 : index
    %c0_110 = arith.constant 0 : index
    %131 = vector.load %arg8[%c0_107, %c1_108, %c0_109, %c0_110] : memref<1x4x32x32xf32, #tpu.memory_space<vmem>>, vector<1x1x32x32xf32>
    %132 = vector.shape_cast %131 : vector<1x1x32x32xf32> to vector<32x32xf32>
    %133 = vector.shape_cast %130 : vector<32x32xf32> to vector<1x1x32x32xf32>
    tpu.vector_store %arg8[%c0_107, %c1_108, %c0_109, %c0_110], %133 {strides = array<i32>} : memref<1x4x32x32xf32, #tpu.memory_space<vmem>>, vector<1x1x32x32xf32>,
    %134 = vector.extract_strided_slice %118 {offsets = [0, 64], sizes = [32, 32], strides = [1, 1]} : vector<32x128xf32> to vector<32x32xf32>
    %135 = vector.extract_strided_slice %119 {offsets = [2, 0], sizes = [1, 1], strides = [1, 1]} : vector<4x1xf32> to vector<1x1xf32>
    %136 = vector.broadcast %135 : vector<1x1xf32> to vector<32x32xf32>
    %137 = arith.addf %134, %136 : vector<32x32xf32>
    %c0_111 = arith.constant 0 : index
    %c2_112 = arith.constant 2 : index
    %c0_113 = arith.constant 0 : index
    %c0_114 = arith.constant 0 : index
    %138 = vector.load %arg8[%c0_111, %c2_112, %c0_113, %c0_114] : memref<1x4x32x32xf32, #tpu.memory_space<vmem>>, vector<1x1x32x32xf32>
    %139 = vector.shape_cast %138 : vector<1x1x32x32xf32> to vector<32x32xf32>
    %140 = vector.shape_cast %137 : vector<32x32xf32> to vector<1x1x32x32xf32>
    tpu.vector_store %arg8[%c0_111, %c2_112, %c0_113, %c0_114], %140 {strides = array<i32>} : memref<1x4x32x32xf32, #tpu.memory_space<vmem>>, vector<1x1x32x32xf32>,
    %141 = vector.extract_strided_slice %118 {offsets = [0, 96], sizes = [32, 32], strides = [1, 1]} : vector<32x128xf32> to vector<32x32xf32>
    %142 = vector.extract_strided_slice %119 {offsets = [3, 0], sizes = [1, 1], strides = [1, 1]} : vector<4x1xf32> to vector<1x1xf32>
    %143 = vector.broadcast %142 : vector<1x1xf32> to vector<32x32xf32>
    %144 = arith.addf %141, %143 : vector<32x32xf32>
    %c0_115 = arith.constant 0 : index
    %c3_116 = arith.constant 3 : index
    %c0_117 = arith.constant 0 : index
    %c0_118 = arith.constant 0 : index
    %145 = vector.load %arg8[%c0_115, %c3_116, %c0_117, %c0_118] : memref<1x4x32x32xf32, #tpu.memory_space<vmem>>, vector<1x1x32x32xf32>
    %146 = vector.shape_cast %145 : vector<1x1x32x32xf32> to vector<32x32xf32>
    %147 = vector.shape_cast %144 : vector<32x32xf32> to vector<1x1x32x32xf32>
    tpu.vector_store %arg8[%c0_115, %c3_116, %c0_117, %c0_118], %147 {strides = array<i32>} : memref<1x4x32x32xf32, #tpu.memory_space<vmem>>, vector<1x1x32x32xf32>,
    return
  }
  func.func @transform_0(%arg0: i32, %arg1: i32) -> (i32, i32, i32) {
    %c0_i32 = arith.constant 0 : i32
    %c0_i32_0 = arith.constant 0 : i32
    %c0_i32_1 = arith.constant 0 : i32
    return %arg0, %c0_i32, %c0_i32_0 : i32, i32, i32
  }
  func.func @transform_1(%arg0: i32, %arg1: i32) -> (i32, i32, i32) {
    %c0_i32 = arith.constant 0 : i32
    %c0_i32_0 = arith.constant 0 : i32
    %c0_i32_1 = arith.constant 0 : i32
    return %arg0, %c0_i32, %c0_i32_0 : i32, i32, i32
  }
  func.func @transform_2(%arg0: i32, %arg1: i32) -> (i32, i32) {
    %c0_i32 = arith.constant 0 : i32
    %c0_i32_0 = arith.constant 0 : i32
    return %arg1, %c0_i32 : i32, i32
  }
  func.func @transform_3(%arg0: i32, %arg1: i32) -> (i32, i32) {
    %c0_i32 = arith.constant 0 : i32
    %c0_i32_0 = arith.constant 0 : i32
    return %arg1, %c0_i32 : i32, i32
  }
  func.func @transform_4(%arg0: i32, %arg1: i32) -> (i32, i32) {
    %c0_i32 = arith.constant 0 : i32
    %c0_i32_0 = arith.constant 0 : i32
    %c0_i32_1 = arith.constant 0 : i32
    return %c0_i32, %c0_i32_0 : i32, i32
  }
  func.func @transform_5(%arg0: i32, %arg1: i32) -> (i32, i32) {
    %c0_i32 = arith.constant 0 : i32
    %c0_i32_0 = arith.constant 0 : i32
    %c0_i32_1 = arith.constant 0 : i32
    return %c0_i32, %c0_i32_0 : i32, i32
  }
  func.func @transform_6(%arg0: i32, %arg1: i32) -> (i32, i32, i32, i32) {
    %c0_i32 = arith.constant 0 : i32
    %c0_i32_0 = arith.constant 0 : i32
    %c0_i32_1 = arith.constant 0 : i32
    return %arg0, %arg1, %c0_i32, %c0_i32_0 : i32, i32, i32, i32
  }
}

</mosaic_0001>

<llo_original>
// kernel: tpu_custom_call.1
$region0: #{tpu_custom_call.1}
  #allocation0 [shape = 'u32[]', space=smem, size = 0x4, offset = 0x4, fixed_abs, tag = 'smem constant byte address 0x4 - core index']
  #allocation1 [shape = 'u32[144,128]{1,0:T(1,128)}', space=vmem, size = 0x12000, scoped, tag = 'internal scratch']
  #allocation2 [shape = 'f32[16,128]{1,0:T(8,128)}', space=vmem, size = 0x2000, scoped, tag = 'scratch operand']
  #allocation3 [shape = 'f32[4,16,32]{2,1,0:T(8,128)}', space=vmem, size = 0x8000, scoped, tag = 'scratch operand']
  %s0 = inlined_call_operand.vmem [shape: f32[2,4,256], index: 0, kind: input, shape index: {}]
  %s1 = inlined_call_operand.vmem [shape: f32[2,4,256], index: 1, kind: input, shape index: {}]
  %s2 = inlined_call_operand.vmem [shape: f32[4,4], index: 2, kind: input, shape index: {}]
  %s3 = inlined_call_operand.vmem [shape: f32[4,1], index: 3, kind: input, shape index: {}]
  %s4 = inlined_call_operand.vmem [shape: f32[16,32], index: 4, kind: input, shape index: {}]
  %s5 = inlined_call_operand.vmem [shape: f32[32,16], index: 5, kind: input, shape index: {}]
  %s6 = inlined_call_operand.hbm [shape: f32[2,4,32,32], index: 6, kind: output, shape index: {}]
  %s7 = sld [smem:[#allocation0]]
  $region57: #{tpu_custom_call.1} parent=0
    _
  %s9 = ssub.s32 1, %s7
  %s10 = scalar_select 0, %s9, %s7
  $region1: #{tpu_custom_call.1} parent=0
    #allocation4 [shape = 'u8[131072]{0}', space=vmem, size = 0x20000, scoped, tag = 'output window, operand 0']
    #allocation5 [shape = 's32[2]{0}', space=sflag, size = 0x8, scoped, tag = 'scoped memory for tpu_custom_call.1']
    %11 = vsyncpa [#allocation5], 0
    %s12 = scalar_lea.sflag [#allocation5], 1
    %13 = vsyncpa %s12, 0
    loop: start=0, step=1, limit=4
    $region2: #{tpu_custom_call.1} parent=1 // loop_pre_header
      _
    $region3: #{tpu_custom_call.1} parent=1 // loop_header
      %s15 = sphi 0, %s19
      %p16 = scmp.ge.s32.totalorder %s15, 4
      %s22 = sphi 0, %s34
      %s23 = sphi 0, %s30
      %s24 = sphi 0, %s22
      %s25 = sphi 0, %s23
      %s26 = sphi 0, %s24
      %s27 = sphi 0, %s25
      %s37 = sphi 0, %s39
      %s40 = sphi 0, %s37
      %s41 = sphi 0, %s40
      %s57 = sphi 0, %s41
      %s63 = sphi 0, %s65
      %s66 = sphi 0, %s63
      %s67 = sphi 0, %s66
      %s83 = sphi 0, %s67
      %s89 = sphi 0, %s91
      %s92 = sphi 0, %s89
      %s93 = sphi 0, %s92
      %s109 = sphi 0, %s93
      %s115 = sphi 0, %s117
      %s118 = sphi 0, %s115
      %s119 = sphi 0, %s118
      %s135 = sphi 0, %s119
      %s139 = sphi 0, %s139
      %s141 = sphi 0, %s139
      %s142 = sphi 0, %s141
      %s156 = sphi 0, %s142
      %s160 = sphi 0, %s160
      %s162 = sphi 0, %s160
      %s163 = sphi 0, %s162
      %s177 = sphi 0, %s163
      %s185 = sphi 0, %s187
      %s188 = sphi 0, %s185
      %s189 = sphi 0, %s188
      %s205 = sphi 0, %s189
    $region4: #{tpu_custom_call.1} parent=1 // loop_header_branch
      %18 = sbr.rel (%p16) target = $region8
    $region5: #{tpu_custom_call.1} parent=1 // loop_body
      %s20 = ssub.s32 %s15, 1
      %s21 = ssub.s32 %s15, 2
      %s28 = sadd.s32 1, %s23
      %p29 = scmp.ge.s32.totalorder %s28, 1
      %s30 = scalar_select %p29, 0, %s28
      %s31 = sadd.s32 1, %s22
      %s32 = scalar_select %p29, %s31, %s22
      %p33 = scmp.ge.s32.totalorder %s32, 2
      %s34 = scalar_select %p33, 0, %s32
      %s35 = ssub.s32 %s22, %s34
      %p36 = scmp.eq.s32.totalorder %s35, 0
      %s38 = sadd.s32 %s37, 1
      %s39 = scalar_select %p36, %s37, %s38
      %p42 = pneg %p36
      %p43 = scmp.eq.s32.totalorder %s15, 1
      %p44 = por %p42, %p43
      %p45 = scmp.ne.s32.totalorder %s37, %s40
      %p46 = scmp.eq.s32.totalorder %s15, 0
      %p47 = por %p45, %p46
      %p48 = scmp.ne.s32.totalorder %s37, %s40
      %p49 = scmp.eq.s32.totalorder %s20, 1
      %p50 = por %p48, %p49
      %p51 = scmp.ne.s32.totalorder %s40, %s41
      %p52 = scmp.eq.s32.totalorder %s20, 0
      %p53 = por %p51, %p52
      %p54 = scmp.ne.s32.totalorder %s40, %s41
      %p55 = scmp.eq.s32.totalorder %s21, 1
      %p56 = por %p54, %p55
      %p58 = scmp.ne.s32.totalorder %s41, %s57
      %p59 = scmp.eq.s32.totalorder %s21, 0
      %p60 = por %p58, %p59
      %s61 = ssub.s32 %s22, %s34
      %p62 = scmp.eq.s32.totalorder %s61, 0
      %s64 = sadd.s32 %s63, 1
      %s65 = scalar_select %p62, %s63, %s64
      %p68 = pneg %p62
      %p69 = scmp.eq.s32.totalorder %s15, 1
      %p70 = por %p68, %p69
      %p71 = scmp.ne.s32.totalorder %s63, %s66
      %p72 = scmp.eq.s32.totalorder %s15, 0
      %p73 = por %p71, %p72
      %p74 = scmp.ne.s32.totalorder %s63, %s66
      %p75 = scmp.eq.s32.totalorder %s20, 1
      %p76 = por %p74, %p75
      %p77 = scmp.ne.s32.totalorder %s66, %s67
      %p78 = scmp.eq.s32.totalorder %s20, 0
      %p79 = por %p77, %p78
      %p80 = scmp.ne.s32.totalorder %s66, %s67
      %p81 = scmp.eq.s32.totalorder %s21, 1
      %p82 = por %p80, %p81
      %p84 = scmp.ne.s32.totalorder %s67, %s83
      %p85 = scmp.eq.s32.totalorder %s21, 0
      %p86 = por %p84, %p85
      %s87 = ssub.s32 %s23, %s30
      %p88 = scmp.eq.s32.totalorder %s87, 0
      %s90 = sadd.s32 %s89, 1
      %s91 = scalar_select %p88, %s89, %s90
      %p94 = pneg %p88
      %p95 = scmp.eq.s32.totalorder %s15, 1
      %p96 = por %p94, %p95
      %p97 = scmp.ne.s32.totalorder %s89, %s92
      %p98 = scmp.eq.s32.totalorder %s15, 0
      %p99 = por %p97, %p98
      %p100 = scmp.ne.s32.totalorder %s89, %s92
      %p101 = scmp.eq.s32.totalorder %s20, 1
      %p102 = por %p100, %p101
      %p103 = scmp.ne.s32.totalorder %s92, %s93
      %p104 = scmp.eq.s32.totalorder %s20, 0
      %p105 = por %p103, %p104
      %p106 = scmp.ne.s32.totalorder %s92, %s93
      %p107 = scmp.eq.s32.totalorder %s21, 1
      %p108 = por %p106, %p107
      %p110 = scmp.ne.s32.totalorder %s93, %s109
      %p111 = scmp.eq.s32.totalorder %s21, 0
      %p112 = por %p110, %p111
      %s113 = ssub.s32 %s23, %s30
      %p114 = scmp.eq.s32.totalorder %s113, 0
      %s116 = sadd.s32 %s115, 1
      %s117 = scalar_select %p114, %s115, %s116
      %p120 = pneg %p114
      %p121 = scmp.eq.s32.totalorder %s15, 1
      %p122 = por %p120, %p121
      %p123 = scmp.ne.s32.totalorder %s115, %s118
      %p124 = scmp.eq.s32.totalorder %s15, 0
      %p125 = por %p123, %p124
      %p126 = scmp.ne.s32.totalorder %s115, %s118
      %p127 = scmp.eq.s32.totalorder %s20, 1
      %p128 = por %p126, %p127
      %p129 = scmp.ne.s32.totalorder %s118, %s119
      %p130 = scmp.eq.s32.totalorder %s20, 0
      %p131 = por %p129, %p130
      %p132 = scmp.ne.s32.totalorder %s118, %s119
      %p133 = scmp.eq.s32.totalorder %s21, 1
      %p134 = por %p132, %p133
      %p136 = scmp.ne.s32.totalorder %s119, %s135
      %p137 = scmp.eq.s32.totalorder %s21, 0
      %p138 = por %p136, %p137
      %s140 = sadd.s32 %s139, 1
      %p143 = scmp.eq.s32.totalorder %s15, 1
      %p144 = scmp.ne.s32.totalorder %s139, %s141
      %p145 = scmp.eq.s32.totalorder %s15, 0
      %p146 = por %p144, %p145
      %p147 = scmp.ne.s32.totalorder %s139, %s141
      %p148 = scmp.eq.s32.totalorder %s20, 1
      %p149 = por %p147, %p148
      %p150 = scmp.ne.s32.totalorder %s141, %s142
      %p151 = scmp.eq.s32.totalorder %s20, 0
      %p152 = por %p150, %p151
      %p153 = scmp.ne.s32.totalorder %s141, %s142
      %p154 = scmp.eq.s32.totalorder %s21, 1
      %p155 = por %p153, %p154
      %p157 = scmp.ne.s32.totalorder %s142, %s156
      %p158 = scmp.eq.s32.totalorder %s21, 0
      %p159 = por %p157, %p158
      %s161 = sadd.s32 %s160, 1
      %p164 = scmp.eq.s32.totalorder %s15, 1
      %p165 = scmp.ne.s32.totalorder %s160, %s162
      %p166 = scmp.eq.s32.totalorder %s15, 0
      %p167 = por %p165, %p166
      %p168 = scmp.ne.s32.totalorder %s160, %s162
      %p169 = scmp.eq.s32.totalorder %s20, 1
      %p170 = por %p168, %p169
      %p171 = scmp.ne.s32.totalorder %s162, %s163
      %p172 = scmp.eq.s32.totalorder %s20, 0
      %p173 = por %p171, %p172
      %p174 = scmp.ne.s32.totalorder %s162, %s163
      %p175 = scmp.eq.s32.totalorder %s21, 1
      %p176 = por %p174, %p175
      %p178 = scmp.ne.s32.totalorder %s163, %s177
      %p179 = scmp.eq.s32.totalorder %s21, 0
      %p180 = por %p178, %p179
      %s181 = ssub.s32 %s22, %s34
      %s182 = ssub.s32 %s23, %s30
      %s183 = sor.u32 %s181, %s182
      %p184 = scmp.eq.s32.totalorder %s183, 0
      %s186 = sadd.s32 %s185, 1
      %s187 = scalar_select %p184, %s185, %s186
      %p190 = pneg %p184
      %p191 = scmp.eq.s32.totalorder %s15, 1
      %p192 = por %p190, %p191
      %p193 = scmp.ne.s32.totalorder %s185, %s188
      %p194 = scmp.eq.s32.totalorder %s15, 0
      %p195 = por %p193, %p194
      %p196 = scmp.ne.s32.totalorder %s185, %s188
      %p197 = scmp.eq.s32.totalorder %s20, 1
      %p198 = por %p196, %p197
      %p199 = scmp.ne.s32.totalorder %s188, %s189
      %p200 = scmp.eq.s32.totalorder %s20, 0
      %p201 = por %p199, %p200
      %p202 = scmp.ne.s32.totalorder %s188, %s189
      %p203 = scmp.eq.s32.totalorder %s21, 1
      %p204 = por %p202, %p203
      %p206 = scmp.ne.s32.totalorder %s189, %s205
      %p207 = scmp.eq.s32.totalorder %s21, 0
      %p208 = por %p206, %p207
      %p209 = scmp.le.s32.totalorder 1, %s15
      %p210 = scmp.lt.s32.totalorder %s15, 3
      %p211 = pnand %p209, %p210
      %p212 = pneg %p211
      // Predicated region
      $region9: #{tpu_custom_call.1} parent=5 // pred_check
        _
      $region10: #{tpu_custom_call.1} parent=5 // pred_check_branch
        %214 = sbr.rel (%p211) target = $region12
      $region11: #{tpu_custom_call.1} parent=5 // pred_region
        %s215 = ssub.s32 %s15, 1
        // Predicated region
        $region13: #{tpu_custom_call.1} parent=11 // pred_check
          %p216 = pneg %p105
        $region14: #{tpu_custom_call.1} parent=11 // pred_check_branch
          %218 = sbr.rel (%p216) target = $region16
        $region15: #{tpu_custom_call.1} parent=11 // pred_region
          %p219 = scmp.lt.s32.totalorder %s25, 0
          %s220 = scalar_select %p219, %s25, 0
          %s221 = smul.addr %s220, 4
          %s222 = scalar_lea.vmem %s2, %s221
        $region16: #{tpu_custom_call.1} parent=11 // pred_fallthru
          _
        // Predicated region
        $region17: #{tpu_custom_call.1} parent=11 // pred_check
          %p223 = pneg %p131
        $region18: #{tpu_custom_call.1} parent=11 // pred_check_branch
          %225 = sbr.rel (%p223) target = $region20
        $region19: #{tpu_custom_call.1} parent=11 // pred_region
          %p226 = scmp.lt.s32.totalorder %s25, 0
          %s227 = scalar_select %p226, %s25, 0
          %s228 = smul.addr %s227, 4
          %s229 = scalar_lea.vmem %s3, %s228
        $region20: #{tpu_custom_call.1} parent=11 // pred_fallthru
          _
        // Predicated region
        $region21: #{tpu_custom_call.1} parent=11 // pred_check
          %p230 = pneg %p152
        $region22: #{tpu_custom_call.1} parent=11 // pred_check_branch
          %232 = sbr.rel (%p230) target = $region24
        $region23: #{tpu_custom_call.1} parent=11 // pred_region
          _
        $region24: #{tpu_custom_call.1} parent=11 // pred_fallthru
          _
        // Predicated region
        $region25: #{tpu_custom_call.1} parent=11 // pred_check
          %p233 = pneg %p173
        $region26: #{tpu_custom_call.1} parent=11 // pred_check_branch
          %235 = sbr.rel (%p233) target = $region28
        $region27: #{tpu_custom_call.1} parent=11 // pred_region
          _
        $region28: #{tpu_custom_call.1} parent=11 // pred_fallthru
          _
      $region12: #{tpu_custom_call.1} parent=5 // pred_fallthru
        _
      %p236 = scmp.lt.s32.totalorder %s15, 2
      // Predicated region
      $region29: #{tpu_custom_call.1} parent=5 // pred_check
        %p237 = pneg %p236
      $region30: #{tpu_custom_call.1} parent=5 // pred_check_branch
        %239 = sbr.rel (%p237) target = $region32
      $region31: #{tpu_custom_call.1} parent=5 // pred_region
        // Predicated region
        $region33: #{tpu_custom_call.1} parent=31 // pred_check
          %p240 = pneg %p47
        $region34: #{tpu_custom_call.1} parent=31 // pred_check_branch
          %242 = sbr.rel (%p240) target = $region36
        $region35: #{tpu_custom_call.1} parent=31 // pred_region
          %p243 = scmp.lt.s32.totalorder %s22, 1
          %s244 = scalar_select %p243, %s22, 1
          %s245 = smul.addr %s244, 2
          %s246 = smul.addr %s245, 4
          %s247 = scalar_lea.vmem %s0, %s246
        $region36: #{tpu_custom_call.1} parent=31 // pred_fallthru
          _
        // Predicated region
        $region37: #{tpu_custom_call.1} parent=31 // pred_check
          %p248 = pneg %p73
        $region38: #{tpu_custom_call.1} parent=31 // pred_check_branch
          %250 = sbr.rel (%p248) target = $region40
        $region39: #{tpu_custom_call.1} parent=31 // pred_region
          %p251 = scmp.lt.s32.totalorder %s22, 1
          %s252 = scalar_select %p251, %s22, 1
          %s253 = smul.addr %s252, 2
          %s254 = smul.addr %s253, 4
          %s255 = scalar_lea.vmem %s1, %s254
        $region40: #{tpu_custom_call.1} parent=31 // pred_fallthru
          _
      $region32: #{tpu_custom_call.1} parent=5 // pred_fallthru
        _
      %p256 = scmp.le.s32.totalorder 1, %s15
      %p257 = scmp.lt.s32.totalorder %s15, 3
      %p258 = pnand %p256, %p257
      %p259 = pneg %p258
      // Predicated region
      $region41: #{tpu_custom_call.1} parent=5 // pred_check
        _
      $region42: #{tpu_custom_call.1} parent=5 // pred_check_branch
        %261 = sbr.rel (%p258) target = $region44
      $region43: #{tpu_custom_call.1} parent=5 // pred_region
        %s262 = ssub.s32 %s15, 1
        %p263 = scmp.lt.s32.totalorder %s24, 1
        %s264 = scalar_select %p263, %s24, 1
        %s265 = smul.addr %s264, 2
        %s266 = smul.addr %s265, 4
        %s267 = scalar_lea.vmem %s0, %s266
        %p268 = pneg %p53
        %p269 = pneg %p50
        %p270 = scmp.lt.s32.totalorder %s24, 1
        %s271 = scalar_select %p270, %s24, 1
        %s272 = smul.addr %s271, 2
        %s273 = smul.addr %s272, 4
        %s274 = scalar_lea.vmem %s1, %s273
        %p275 = pneg %p79
        %p276 = pneg %p76
        %p277 = scmp.lt.s32.totalorder %s25, 0
        %s278 = scalar_select %p277, %s25, 0
        %s279 = smul.addr %s278, 4
        %s280 = scalar_lea.vmem %s2, %s279
        %p281 = pneg %p105
        %p282 = pneg %p102
        %p283 = scmp.lt.s32.totalorder %s25, 0
        %s284 = scalar_select %p283, %s25, 0
        %s285 = smul.addr %s284, 4
        %s286 = scalar_lea.vmem %s3, %s285
        %p287 = pneg %p131
        %p288 = pneg %p128
        %p289 = pneg %p152
        %p290 = pneg %p149
        %p291 = pneg %p173
        %p292 = pneg %p170
        %p293 = pneg %p201
        %p294 = pneg %p198
        %s295 = sand.u32 %s188, 1
        %s296 = scalar_lea.sflag [#allocation5], %s295
        %s297 = sand.u32 %s188, 1
        %s298 = smul.addr %s297, 128
        %s299 = scalar_lea.vmem [#allocation4], %s298
        %p300 = scmp.lt.s32.totalorder %s24, 1
        %s301 = scalar_select %p300, %s24, 1
        %s302 = smul.addr %s301, 2
        %s303 = smul.addr %s302, 4
        %s304 = scalar_lea.vmem %s0, %s303
        %p305 = scmp.lt.s32.totalorder %s24, 1
        %s306 = scalar_select %p305, %s24, 1
        %s307 = smul.addr %s306, 2
        %s308 = smul.addr %s307, 4
        %s309 = scalar_lea.vmem %s1, %s308
        %p310 = scmp.lt.s32.totalorder %s25, 0
        %s311 = scalar_select %p310, %s25, 0
        %s312 = smul.addr %s311, 4
        %s313 = scalar_lea.vmem %s2, %s312
        %p314 = scmp.lt.s32.totalorder %s25, 0
        %s315 = scalar_select %p314, %s25, 0
        %s316 = smul.addr %s315, 4
        %s317 = scalar_lea.vmem %s3, %s316
        %s318 = smul.u32 4, %s25
        %v319 = vld [vmem:[%s304] sm:$0xff]
        %v320 = vld [vmem:[%s309] sm:$0xff]
        %v321 = vadd.f32 %v319, %v320
        %v322 = vld [vmem:[%s313] sm:$0xf]
        %v324 = vcombine.high %v321, %v321
        %vm325 = vcmask 31744
        %v327 = vsel %vm325, %v322, 0
        %vm329 = vcmask 1043456
        %v330 = vsel %vm329, %v321, 0
        %v332 = vsel %vm329, %v324, 0
        %334 = vmatprep.subr.mxu0 0.0
        %335 = vmatpush1.msra.mxu0 0.0
        %336 = vmatprep.subr.mxu0 0.0
        %337 = vmatpush1.msra.mxu0 0.0
        %338 = vmatprep.subr.mxu0 0.0
        %339 = vmatpush1.msra.mxu0 0.0
        %340 = vmatprep.subr.mxu0 0.0
        %341 = vmatpush1.msra.mxu0 0.0
        %342 = vmatprep.subr.mxu0 0.0
        %343 = vmatpush1.msra.mxu0 0.0
        %344 = vmatprep.subr.mxu0 0.0
        %345 = vmatpush1.msra.mxu0 0.0
        %346 = vmatprep.subr.mxu0 0.0
        %347 = vmatpush1.msra.mxu0 0.0
        %348 = vmatprep.subr.mxu0 0.0
        %349 = vmatpush1.msra.mxu0 0.0
        %350 = vmatprep.subr.mxu0 0.0
        %351 = vmatpush1.msra.mxu0 0.0
        %352 = vmatprep.subr.mxu0 0.0
        %353 = vmatpush1.msra.mxu0 0.0
        %354 = vmatprep.subr.mxu0 0.0
        %355 = vmatpush1.msra.mxu0 0.0
        %356 = vmatprep.subr.mxu0 0.0
        %357 = vmatpush1.msra.mxu0 0.0
        %358 = vmatprep.subr.mxu0 0.0
        %359 = vmatpush1.msra.mxu0 0.0
        %360 = vmatprep.subr.mxu0 0.0
        %361 = vmatpush1.msra.mxu0 0.0
        %362 = vmatprep.subr.mxu0 0.0
        %363 = vmatpush1.msra.mxu0 0.0
        %364 = vmatprep.subr.mxu0 %v332
        %365 = vmatpush1.msra.mxu0 %v330
        %366 = vmatprep.subr.mxu0 0.0
        %367 = vmatpush2.msra.mxu0 0.0
        %368 = vmatprep.subr.mxu0 0.0
        %369 = vmatpush2.msra.mxu0 0.0
        %370 = vmatprep.subr.mxu0 0.0
        %371 = vmatpush2.msra.mxu0 0.0
        %372 = vmatprep.subr.mxu0 0.0
        %373 = vmatpush2.msra.mxu0 0.0
        %374 = vmatprep.subr.mxu0 0.0
        %375 = vmatpush2.msra.mxu0 0.0
        %376 = vmatprep.subr.mxu0 0.0
        %377 = vmatpush2.msra.mxu0 0.0
        %378 = vmatprep.subr.mxu0 0.0
        %379 = vmatpush2.msra.mxu0 0.0
        %380 = vmatprep.subr.mxu0 0.0
        %381 = vmatpush2.msra.mxu0 0.0
        %382 = vmatprep.subr.mxu0 0.0
        %383 = vmatpush2.msra.mxu0 0.0
        %384 = vmatprep.subr.mxu0 0.0
        %385 = vmatpush2.msra.mxu0 0.0
        %386 = vmatprep.subr.mxu0 0.0
        %387 = vmatpush2.msra.mxu0 0.0
        %388 = vmatprep.subr.mxu0 0.0
        %389 = vmatpush2.msra.mxu0 0.0
        %390 = vmatprep.subr.mxu0 0.0
        %391 = vmatpush2.msra.mxu0 0.0
        %392 = vmatprep.subr.mxu0 0.0
        %393 = vmatpush2.msra.mxu0 0.0
        %394 = vmatprep.subr.mxu0 0.0
        %395 = vmatpush2.msra.mxu0 0.0
        %396 = vmatprep.subr.mxu0 0.0
        %397 = vmatpush2.msra.mxu0 0.0
        %398 = vmatprep.mubr.f32.mxu0 0.0
        %399 = vmatmul.mubr.f32.gmra.mxu0 %v327
        %v400 = vpop.f32.mrf.mxu0
        %v401 = vadd.f32 0.0, %v400
        %v402 = vpop.f32.mrf.mxu0
        %v403 = vadd.f32 0.0, %v402
        %404 = vdwg.mxu0
        %v405 = vld [vmem:[%s4] sm:$0xff]
        %v406 = vld [vmem:[%s4 + $0x8] sm:$0xff]
        %vm407 = vcmask 130048
        %v409 = vsel %vm407, %v401, 0
        %411 = vmatprep.subr.mxu0 0.0
        %412 = vmatpush1.msra.mxu0 0.0
        %413 = vmatprep.subr.mxu0 0.0
        %414 = vmatpush1.msra.mxu0 0.0
        %415 = vmatprep.subr.mxu0 0.0
        %416 = vmatpush1.msra.mxu0 0.0
        %417 = vmatprep.subr.mxu0 0.0
        %418 = vmatpush1.msra.mxu0 0.0
        %419 = vmatprep.subr.mxu0 0.0
        %420 = vmatpush1.msra.mxu0 0.0
        %421 = vmatprep.subr.mxu0 0.0
        %422 = vmatpush1.msra.mxu0 0.0
        %423 = vmatprep.subr.mxu0 0.0
        %424 = vmatpush1.msra.mxu0 0.0
        %425 = vmatprep.subr.mxu0 0.0
        %426 = vmatpush1.msra.mxu0 0.0
        %427 = vmatprep.subr.mxu0 0.0
        %428 = vmatpush1.msra.mxu0 0.0
        %429 = vmatprep.subr.mxu0 0.0
        %430 = vmatpush1.msra.mxu0 0.0
        %431 = vmatprep.subr.mxu0 0.0
        %432 = vmatpush1.msra.mxu0 0.0
        %433 = vmatprep.subr.mxu0 0.0
        %434 = vmatpush1.msra.mxu0 0.0
        %435 = vmatprep.subr.mxu0 0.0
        %436 = vmatpush1.msra.mxu0 0.0
        %437 = vmatprep.subr.mxu0 0.0
        %438 = vmatpush1.msra.mxu0 0.0
        %439 = vmatprep.subr.mxu0 0.0
        %440 = vmatpush1.msra.mxu0 %v406
        %441 = vmatprep.subr.mxu0 0.0
        %442 = vmatpush1.msra.mxu0 %v405
        %443 = vmatprep.subr.mxu0 0.0
        %444 = vmatpush2.msra.mxu0 0.0
        %445 = vmatprep.subr.mxu0 0.0
        %446 = vmatpush2.msra.mxu0 0.0
        %447 = vmatprep.subr.mxu0 0.0
        %448 = vmatpush2.msra.mxu0 0.0
        %449 = vmatprep.subr.mxu0 0.0
        %450 = vmatpush2.msra.mxu0 0.0
        %451 = vmatprep.subr.mxu0 0.0
        %452 = vmatpush2.msra.mxu0 0.0
        %453 = vmatprep.subr.mxu0 0.0
        %454 = vmatpush2.msra.mxu0 0.0
        %455 = vmatprep.subr.mxu0 0.0
        %456 = vmatpush2.msra.mxu0 0.0
        %457 = vmatprep.subr.mxu0 0.0
        %458 = vmatpush2.msra.mxu0 0.0
        %459 = vmatprep.subr.mxu0 0.0
        %460 = vmatpush2.msra.mxu0 0.0
        %461 = vmatprep.subr.mxu0 0.0
        %462 = vmatpush2.msra.mxu0 0.0
        %463 = vmatprep.subr.mxu0 0.0
        %464 = vmatpush2.msra.mxu0 0.0
        %465 = vmatprep.subr.mxu0 0.0
        %466 = vmatpush2.msra.mxu0 0.0
        %467 = vmatprep.subr.mxu0 0.0
        %468 = vmatpush2.msra.mxu0 0.0
        %469 = vmatprep.subr.mxu0 0.0
        %470 = vmatpush2.msra.mxu0 0.0
        %471 = vmatprep.subr.mxu0 0.0
        %472 = vmatpush2.msra.mxu0 0.0
        %473 = vmatprep.subr.mxu0 0.0
        %474 = vmatpush2.msra.mxu0 0.0
        %475 = vmatprep.mubr.f32.mxu0 0.0
        %476 = vmatmul.mubr.f32.gmra.mxu0 %v409
        %v477 = vpop.f32.mrf.mxu0
        %v478 = vadd.f32 0.0, %v477
        %v479 = vpop.f32.mrf.mxu0
        %480 = vdwg.mxu0
        %v483 = vunpack.c.l.s4 1966171168
        %v484 = vunpack.c.0.s8 %v483
        %v485 = vlaneseq
        %v486 = vshrl.u32 %v485, 7
        %v487 = vsub.s32 %v484, %v486
        %v488 = vrot.slane %v478, %v487
        %v489 = vcombine.high %v488, %v488
        %v491 = vunpack.c.l.s4 1966171168
        %v492 = vunpack.c.0.s8 %v491
        %v493 = vlaneseq
        %v494 = vshrl.u32 %v493, 7
        %v495 = vsub.s32 %v492, %v494
        %v496 = vrot.slane %v488, %v495
        %v498 = vunpack.c.l.s4 1966171168
        %v499 = vunpack.c.0.s8 %v498
        %v500 = vlaneseq
        %v501 = vshrl.u32 %v500, 7
        %v502 = vsub.s32 %v499, %v501
        %v503 = vrot.slane %v489, %v502
        %v504 = vcombine.high %v496, %v496
        %v505 = vcombine.high %v503, %v503
        %vm510 = vcmask 253952
        %511 = vst.msk [vmem:[#allocation3] sm:$0x1] %vm510, %v496
        %512 = vst.msk [vmem:[#allocation3 + $0x10] sm:$0x1] %vm510, %v503
        %513 = vst.msk [vmem:[#allocation3 + $0x20] sm:$0x1] %vm510, %v504
        %514 = vst.msk [vmem:[#allocation3 + $0x30] sm:$0x1] %vm510, %v505
        %v515 = vld [vmem:[%s4] sm:$0xff]
        %v516 = vld [vmem:[%s4 + $0x8] sm:$0xff]
        %517 = vrot.lane.b32.xlu0 %v401, 112
        %v518 = vpop.permute.xlu0 %517
        %v519 = vsel %vm407, %v518, 0
        %521 = vmatprep.subr.mxu0 0.0
        %522 = vmatpush1.msra.mxu0 0.0
        %523 = vmatprep.subr.mxu0 0.0
        %524 = vmatpush1.msra.mxu0 0.0
        %525 = vmatprep.subr.mxu0 0.0
        %526 = vmatpush1.msra.mxu0 0.0
        %527 = vmatprep.subr.mxu0 0.0
        %528 = vmatpush1.msra.mxu0 0.0
        %529 = vmatprep.subr.mxu0 0.0
        %530 = vmatpush1.msra.mxu0 0.0
        %531 = vmatprep.subr.mxu0 0.0
        %532 = vmatpush1.msra.mxu0 0.0
        %533 = vmatprep.subr.mxu0 0.0
        %534 = vmatpush1.msra.mxu0 0.0
        %535 = vmatprep.subr.mxu0 0.0
        %536 = vmatpush1.msra.mxu0 0.0
        %537 = vmatprep.subr.mxu0 0.0
        %538 = vmatpush1.msra.mxu0 0.0
        %539 = vmatprep.subr.mxu0 0.0
        %540 = vmatpush1.msra.mxu0 0.0
        %541 = vmatprep.subr.mxu0 0.0
        %542 = vmatpush1.msra.mxu0 0.0
        %543 = vmatprep.subr.mxu0 0.0
        %544 = vmatpush1.msra.mxu0 0.0
        %545 = vmatprep.subr.mxu0 0.0
        %546 = vmatpush1.msra.mxu0 0.0
        %547 = vmatprep.subr.mxu0 0.0
        %548 = vmatpush1.msra.mxu0 0.0
        %549 = vmatprep.subr.mxu0 0.0
        %550 = vmatpush1.msra.mxu0 %v516
        %551 = vmatprep.subr.mxu0 0.0
        %552 = vmatpush1.msra.mxu0 %v515
        %553 = vmatprep.subr.mxu0 0.0
        %554 = vmatpush2.msra.mxu0 0.0
        %555 = vmatprep.subr.mxu0 0.0
        %556 = vmatpush2.msra.mxu0 0.0
        %557 = vmatprep.subr.mxu0 0.0
        %558 = vmatpush2.msra.mxu0 0.0
        %559 = vmatprep.subr.mxu0 0.0
        %560 = vmatpush2.msra.mxu0 0.0
        %561 = vmatprep.subr.mxu0 0.0
        %562 = vmatpush2.msra.mxu0 0.0
        %563 = vmatprep.subr.mxu0 0.0
        %564 = vmatpush2.msra.mxu0 0.0
        %565 = vmatprep.subr.mxu0 0.0
        %566 = vmatpush2.msra.mxu0 0.0
        %567 = vmatprep.subr.mxu0 0.0
        %568 = vmatpush2.msra.mxu0 0.0
        %569 = vmatprep.subr.mxu0 0.0
        %570 = vmatpush2.msra.mxu0 0.0
        %571 = vmatprep.subr.mxu0 0.0
        %572 = vmatpush2.msra.mxu0 0.0
        %573 = vmatprep.subr.mxu0 0.0
        %574 = vmatpush2.msra.mxu0 0.0
        %575 = vmatprep.subr.mxu0 0.0
        %576 = vmatpush2.msra.mxu0 0.0
        %577 = vmatprep.subr.mxu0 0.0
        %578 = vmatpush2.msra.mxu0 0.0
        %579 = vmatprep.subr.mxu0 0.0
        %580 = vmatpush2.msra.mxu0 0.0
        %581 = vmatprep.subr.mxu0 0.0
        %582 = vmatpush2.msra.mxu0 0.0
        %583 = vmatprep.subr.mxu0 0.0
        %584 = vmatpush2.msra.mxu0 0.0
        %585 = vmatprep.mubr.f32.mxu0 0.0
        %586 = vmatmul.mubr.f32.gmra.mxu0 %v519
        %v587 = vpop.f32.mrf.mxu0
        %v588 = vadd.f32 0.0, %v587
        %v589 = vpop.f32.mrf.mxu0
        %590 = vdwg.mxu0
        %v593 = vunpack.c.l.s4 1966171168
        %v594 = vunpack.c.0.s8 %v593
        %v595 = vlaneseq
        %v596 = vshrl.u32 %v595, 7
        %v597 = vsub.s32 %v594, %v596
        %v598 = vrot.slane %v588, %v597
        %v599 = vcombine.high %v598, %v598
        %v601 = vunpack.c.l.s4 1966171168
        %v602 = vunpack.c.0.s8 %v601
        %v603 = vlaneseq
        %v604 = vshrl.u32 %v603, 7
        %v605 = vsub.s32 %v602, %v604
        %v606 = vrot.slane %v598, %v605
        %v608 = vunpack.c.l.s4 1966171168
        %v609 = vunpack.c.0.s8 %v608
        %v610 = vlaneseq
        %v611 = vshrl.u32 %v610, 7
        %v612 = vsub.s32 %v609, %v611
        %v613 = vrot.slane %v599, %v612
        %v614 = vcombine.high %v606, %v606
        %v615 = vcombine.high %v613, %v613
        %620 = vst.msk [vmem:[#allocation3 + $0x1] sm:$0x1] %vm510, %v606
        %621 = vst.msk [vmem:[#allocation3 + $0x11] sm:$0x1] %vm510, %v613
        %622 = vst.msk [vmem:[#allocation3 + $0x21] sm:$0x1] %vm510, %v614
        %623 = vst.msk [vmem:[#allocation3 + $0x31] sm:$0x1] %vm510, %v615
        %v624 = vld [vmem:[%s4] sm:$0xff]
        %v625 = vld [vmem:[%s4 + $0x8] sm:$0xff]
        %626 = vrot.lane.b32.xlu0 %v401, 96
        %v627 = vpop.permute.xlu0 %626
        %v628 = vsel %vm407, %v627, 0
        %630 = vmatprep.subr.mxu0 0.0
        %631 = vmatpush1.msra.mxu0 0.0
        %632 = vmatprep.subr.mxu0 0.0
        %633 = vmatpush1.msra.mxu0 0.0
        %634 = vmatprep.subr.mxu0 0.0
        %635 = vmatpush1.msra.mxu0 0.0
        %636 = vmatprep.subr.mxu0 0.0
        %637 = vmatpush1.msra.mxu0 0.0
        %638 = vmatprep.subr.mxu0 0.0
        %639 = vmatpush1.msra.mxu0 0.0
        %640 = vmatprep.subr.mxu0 0.0
        %641 = vmatpush1.msra.mxu0 0.0
        %642 = vmatprep.subr.mxu0 0.0
        %643 = vmatpush1.msra.mxu0 0.0
        %644 = vmatprep.subr.mxu0 0.0
        %645 = vmatpush1.msra.mxu0 0.0
        %646 = vmatprep.subr.mxu0 0.0
        %647 = vmatpush1.msra.mxu0 0.0
        %648 = vmatprep.subr.mxu0 0.0
        %649 = vmatpush1.msra.mxu0 0.0
        %650 = vmatprep.subr.mxu0 0.0
        %651 = vmatpush1.msra.mxu0 0.0
        %652 = vmatprep.subr.mxu0 0.0
        %653 = vmatpush1.msra.mxu0 0.0
        %654 = vmatprep.subr.mxu0 0.0
        %655 = vmatpush1.msra.mxu0 0.0
        %656 = vmatprep.subr.mxu0 0.0
        %657 = vmatpush1.msra.mxu0 0.0
        %658 = vmatprep.subr.mxu0 0.0
        %659 = vmatpush1.msra.mxu0 %v625
        %660 = vmatprep.subr.mxu0 0.0
        %661 = vmatpush1.msra.mxu0 %v624
        %662 = vmatprep.subr.mxu0 0.0
        %663 = vmatpush2.msra.mxu0 0.0
        %664 = vmatprep.subr.mxu0 0.0
        %665 = vmatpush2.msra.mxu0 0.0
        %666 = vmatprep.subr.mxu0 0.0
        %667 = vmatpush2.msra.mxu0 0.0
        %668 = vmatprep.subr.mxu0 0.0
        %669 = vmatpush2.msra.mxu0 0.0
        %670 = vmatprep.subr.mxu0 0.0
        %671 = vmatpush2.msra.mxu0 0.0
        %672 = vmatprep.subr.mxu0 0.0
        %673 = vmatpush2.msra.mxu0 0.0
        %674 = vmatprep.subr.mxu0 0.0
        %675 = vmatpush2.msra.mxu0 0.0
        %676 = vmatprep.subr.mxu0 0.0
        %677 = vmatpush2.msra.mxu0 0.0
        %678 = vmatprep.subr.mxu0 0.0
        %679 = vmatpush2.msra.mxu0 0.0
        %680 = vmatprep.subr.mxu0 0.0
        %681 = vmatpush2.msra.mxu0 0.0
        %682 = vmatprep.subr.mxu0 0.0
        %683 = vmatpush2.msra.mxu0 0.0
        %684 = vmatprep.subr.mxu0 0.0
        %685 = vmatpush2.msra.mxu0 0.0
        %686 = vmatprep.subr.mxu0 0.0
        %687 = vmatpush2.msra.mxu0 0.0
        %688 = vmatprep.subr.mxu0 0.0
        %689 = vmatpush2.msra.mxu0 0.0
        %690 = vmatprep.subr.mxu0 0.0
        %691 = vmatpush2.msra.mxu0 0.0
        %692 = vmatprep.subr.mxu0 0.0
        %693 = vmatpush2.msra.mxu0 0.0
        %694 = vmatprep.mubr.f32.mxu0 0.0
        %695 = vmatmul.mubr.f32.gmra.mxu0 %v628
        %v696 = vpop.f32.mrf.mxu0
        %v697 = vadd.f32 0.0, %v696
        %v698 = vpop.f32.mrf.mxu0
        %699 = vdwg.mxu0
        %v702 = vunpack.c.l.s4 1966171168
        %v703 = vunpack.c.0.s8 %v702
        %v704 = vlaneseq
        %v705 = vshrl.u32 %v704, 7
        %v706 = vsub.s32 %v703, %v705
        %v707 = vrot.slane %v697, %v706
        %v708 = vcombine.high %v707, %v707
        %v710 = vunpack.c.l.s4 1966171168
        %v711 = vunpack.c.0.s8 %v710
        %v712 = vlaneseq
        %v713 = vshrl.u32 %v712, 7
        %v714 = vsub.s32 %v711, %v713
        %v715 = vrot.slane %v707, %v714
        %v717 = vunpack.c.l.s4 1966171168
        %v718 = vunpack.c.0.s8 %v717
        %v719 = vlaneseq
        %v720 = vshrl.u32 %v719, 7
        %v721 = vsub.s32 %v718, %v720
        %v722 = vrot.slane %v708, %v721
        %v723 = vcombine.high %v715, %v715
        %v724 = vcombine.high %v722, %v722
        %729 = vst.msk [vmem:[#allocation3 + $0x2] sm:$0x1] %vm510, %v715
        %730 = vst.msk [vmem:[#allocation3 + $0x12] sm:$0x1] %vm510, %v722
        %731 = vst.msk [vmem:[#allocation3 + $0x22] sm:$0x1] %vm510, %v723
        %732 = vst.msk [vmem:[#allocation3 + $0x32] sm:$0x1] %vm510, %v724
        %v733 = vld [vmem:[%s4] sm:$0xff]
        %v734 = vld [vmem:[%s4 + $0x8] sm:$0xff]
        %735 = vrot.lane.b32.xlu0 %v401, 80
        %v736 = vpop.permute.xlu0 %735
        %v737 = vsel %vm407, %v736, 0
        %739 = vmatprep.subr.mxu0 0.0
        %740 = vmatpush1.msra.mxu0 0.0
        %741 = vmatprep.subr.mxu0 0.0
        %742 = vmatpush1.msra.mxu0 0.0
        %743 = vmatprep.subr.mxu0 0.0
        %744 = vmatpush1.msra.mxu0 0.0
        %745 = vmatprep.subr.mxu0 0.0
        %746 = vmatpush1.msra.mxu0 0.0
        %747 = vmatprep.subr.mxu0 0.0
        %748 = vmatpush1.msra.mxu0 0.0
        %749 = vmatprep.subr.mxu0 0.0
        %750 = vmatpush1.msra.mxu0 0.0
        %751 = vmatprep.subr.mxu0 0.0
        %752 = vmatpush1.msra.mxu0 0.0
        %753 = vmatprep.subr.mxu0 0.0
        %754 = vmatpush1.msra.mxu0 0.0
        %755 = vmatprep.subr.mxu0 0.0
        %756 = vmatpush1.msra.mxu0 0.0
        %757 = vmatprep.subr.mxu0 0.0
        %758 = vmatpush1.msra.mxu0 0.0
        %759 = vmatprep.subr.mxu0 0.0
        %760 = vmatpush1.msra.mxu0 0.0
        %761 = vmatprep.subr.mxu0 0.0
        %762 = vmatpush1.msra.mxu0 0.0
        %763 = vmatprep.subr.mxu0 0.0
        %764 = vmatpush1.msra.mxu0 0.0
        %765 = vmatprep.subr.mxu0 0.0
        %766 = vmatpush1.msra.mxu0 0.0
        %767 = vmatprep.subr.mxu0 0.0
        %768 = vmatpush1.msra.mxu0 %v734
        %769 = vmatprep.subr.mxu0 0.0
        %770 = vmatpush1.msra.mxu0 %v733
        %771 = vmatprep.subr.mxu0 0.0
        %772 = vmatpush2.msra.mxu0 0.0
        %773 = vmatprep.subr.mxu0 0.0
        %774 = vmatpush2.msra.mxu0 0.0
        %775 = vmatprep.subr.mxu0 0.0
        %776 = vmatpush2.msra.mxu0 0.0
        %777 = vmatprep.subr.mxu0 0.0
        %778 = vmatpush2.msra.mxu0 0.0
        %779 = vmatprep.subr.mxu0 0.0
        %780 = vmatpush2.msra.mxu0 0.0
        %781 = vmatprep.subr.mxu0 0.0
        %782 = vmatpush2.msra.mxu0 0.0
        %783 = vmatprep.subr.mxu0 0.0
        %784 = vmatpush2.msra.mxu0 0.0
        %785 = vmatprep.subr.mxu0 0.0
        %786 = vmatpush2.msra.mxu0 0.0
        %787 = vmatprep.subr.mxu0 0.0
        %788 = vmatpush2.msra.mxu0 0.0
        %789 = vmatprep.subr.mxu0 0.0
        %790 = vmatpush2.msra.mxu0 0.0
        %791 = vmatprep.subr.mxu0 0.0
        %792 = vmatpush2.msra.mxu0 0.0
        %793 = vmatprep.subr.mxu0 0.0
        %794 = vmatpush2.msra.mxu0 0.0
        %795 = vmatprep.subr.mxu0 0.0
        %796 = vmatpush2.msra.mxu0 0.0
        %797 = vmatprep.subr.mxu0 0.0
        %798 = vmatpush2.msra.mxu0 0.0
        %799 = vmatprep.subr.mxu0 0.0
        %800 = vmatpush2.msra.mxu0 0.0
        %801 = vmatprep.subr.mxu0 0.0
        %802 = vmatpush2.msra.mxu0 0.0
        %803 = vmatprep.mubr.f32.mxu0 0.0
        %804 = vmatmul.mubr.f32.gmra.mxu0 %v737
        %v805 = vpop.f32.mrf.mxu0
        %v806 = vadd.f32 0.0, %v805
        %v807 = vpop.f32.mrf.mxu0
        %808 = vdwg.mxu0
        %v811 = vunpack.c.l.s4 1966171168
        %v812 = vunpack.c.0.s8 %v811
        %v813 = vlaneseq
        %v814 = vshrl.u32 %v813, 7
        %v815 = vsub.s32 %v812, %v814
        %v816 = vrot.slane %v806, %v815
        %v817 = vcombine.high %v816, %v816
        %v819 = vunpack.c.l.s4 1966171168
        %v820 = vunpack.c.0.s8 %v819
        %v821 = vlaneseq
        %v822 = vshrl.u32 %v821, 7
        %v823 = vsub.s32 %v820, %v822
        %v824 = vrot.slane %v816, %v823
        %v826 = vunpack.c.l.s4 1966171168
        %v827 = vunpack.c.0.s8 %v826
        %v828 = vlaneseq
        %v829 = vshrl.u32 %v828, 7
        %v830 = vsub.s32 %v827, %v829
        %v831 = vrot.slane %v817, %v830
        %v832 = vcombine.high %v824, %v824
        %v833 = vcombine.high %v831, %v831
        %838 = vst.msk [vmem:[#allocation3 + $0x3] sm:$0x1] %vm510, %v824
        %839 = vst.msk [vmem:[#allocation3 + $0x13] sm:$0x1] %vm510, %v831
        %840 = vst.msk [vmem:[#allocation3 + $0x23] sm:$0x1] %vm510, %v832
        %841 = vst.msk [vmem:[#allocation3 + $0x33] sm:$0x1] %vm510, %v833
        %v842 = vld [vmem:[%s4] sm:$0xff]
        %v843 = vld [vmem:[%s4 + $0x8] sm:$0xff]
        %844 = vrot.lane.b32.xlu0 %v401, 64
        %v845 = vpop.permute.xlu0 %844
        %v846 = vsel %vm407, %v845, 0
        %848 = vmatprep.subr.mxu0 0.0
        %849 = vmatpush1.msra.mxu0 0.0
        %850 = vmatprep.subr.mxu0 0.0
        %851 = vmatpush1.msra.mxu0 0.0
        %852 = vmatprep.subr.mxu0 0.0
        %853 = vmatpush1.msra.mxu0 0.0
        %854 = vmatprep.subr.mxu0 0.0
        %855 = vmatpush1.msra.mxu0 0.0
        %856 = vmatprep.subr.mxu0 0.0
        %857 = vmatpush1.msra.mxu0 0.0
        %858 = vmatprep.subr.mxu0 0.0
        %859 = vmatpush1.msra.mxu0 0.0
        %860 = vmatprep.subr.mxu0 0.0
        %861 = vmatpush1.msra.mxu0 0.0
        %862 = vmatprep.subr.mxu0 0.0
        %863 = vmatpush1.msra.mxu0 0.0
        %864 = vmatprep.subr.mxu0 0.0
        %865 = vmatpush1.msra.mxu0 0.0
        %866 = vmatprep.subr.mxu0 0.0
        %867 = vmatpush1.msra.mxu0 0.0
        %868 = vmatprep.subr.mxu0 0.0
        %869 = vmatpush1.msra.mxu0 0.0
        %870 = vmatprep.subr.mxu0 0.0
        %871 = vmatpush1.msra.mxu0 0.0
        %872 = vmatprep.subr.mxu0 0.0
        %873 = vmatpush1.msra.mxu0 0.0
        %874 = vmatprep.subr.mxu0 0.0
        %875 = vmatpush1.msra.mxu0 0.0
        %876 = vmatprep.subr.mxu0 0.0
        %877 = vmatpush1.msra.mxu0 %v843
        %878 = vmatprep.subr.mxu0 0.0
        %879 = vmatpush1.msra.mxu0 %v842
        %880 = vmatprep.subr.mxu0 0.0
        %881 = vmatpush2.msra.mxu0 0.0
        %882 = vmatprep.subr.mxu0 0.0
        %883 = vmatpush2.msra.mxu0 0.0
        %884 = vmatprep.subr.mxu0 0.0
        %885 = vmatpush2.msra.mxu0 0.0
        %886 = vmatprep.subr.mxu0 0.0
        %887 = vmatpush2.msra.mxu0 0.0
        %888 = vmatprep.subr.mxu0 0.0
        %889 = vmatpush2.msra.mxu0 0.0
        %890 = vmatprep.subr.mxu0 0.0
        %891 = vmatpush2.msra.mxu0 0.0
        %892 = vmatprep.subr.mxu0 0.0
        %893 = vmatpush2.msra.mxu0 0.0
        %894 = vmatprep.subr.mxu0 0.0
        %895 = vmatpush2.msra.mxu0 0.0
        %896 = vmatprep.subr.mxu0 0.0
        %897 = vmatpush2.msra.mxu0 0.0
        %898 = vmatprep.subr.mxu0 0.0
        %899 = vmatpush2.msra.mxu0 0.0
        %900 = vmatprep.subr.mxu0 0.0
        %901 = vmatpush2.msra.mxu0 0.0
        %902 = vmatprep.subr.mxu0 0.0
        %903 = vmatpush2.msra.mxu0 0.0
        %904 = vmatprep.subr.mxu0 0.0
        %905 = vmatpush2.msra.mxu0 0.0
        %906 = vmatprep.subr.mxu0 0.0
        %907 = vmatpush2.msra.mxu0 0.0
        %908 = vmatprep.subr.mxu0 0.0
        %909 = vmatpush2.msra.mxu0 0.0
        %910 = vmatprep.subr.mxu0 0.0
        %911 = vmatpush2.msra.mxu0 0.0
        %912 = vmatprep.mubr.f32.mxu0 0.0
        %913 = vmatmul.mubr.f32.gmra.mxu0 %v846
        %v914 = vpop.f32.mrf.mxu0
        %v915 = vadd.f32 0.0, %v914
        %v916 = vpop.f32.mrf.mxu0
        %917 = vdwg.mxu0
        %v920 = vunpack.c.l.s4 1966171168
        %v921 = vunpack.c.0.s8 %v920
        %v922 = vlaneseq
        %v923 = vshrl.u32 %v922, 7
        %v924 = vsub.s32 %v921, %v923
        %v925 = vrot.slane %v915, %v924
        %v926 = vcombine.high %v925, %v925
        %v928 = vunpack.c.l.s4 1966171168
        %v929 = vunpack.c.0.s8 %v928
        %v930 = vlaneseq
        %v931 = vshrl.u32 %v930, 7
        %v932 = vsub.s32 %v929, %v931
        %v933 = vrot.slane %v925, %v932
        %v935 = vunpack.c.l.s4 1966171168
        %v936 = vunpack.c.0.s8 %v935
        %v937 = vlaneseq
        %v938 = vshrl.u32 %v937, 7
        %v939 = vsub.s32 %v936, %v938
        %v940 = vrot.slane %v926, %v939
        %v941 = vcombine.high %v933, %v933
        %v942 = vcombine.high %v940, %v940
        %947 = vst.msk [vmem:[#allocation3 + $0x4] sm:$0x1] %vm510, %v933
        %948 = vst.msk [vmem:[#allocation3 + $0x14] sm:$0x1] %vm510, %v940
        %949 = vst.msk [vmem:[#allocation3 + $0x24] sm:$0x1] %vm510, %v941
        %950 = vst.msk [vmem:[#allocation3 + $0x34] sm:$0x1] %vm510, %v942
        %v951 = vld [vmem:[%s4] sm:$0xff]
        %v952 = vld [vmem:[%s4 + $0x8] sm:$0xff]
        %953 = vrot.lane.b32.xlu0 %v401, 48
        %v954 = vpop.permute.xlu0 %953
        %v955 = vsel %vm407, %v954, 0
        %957 = vmatprep.subr.mxu0 0.0
        %958 = vmatpush1.msra.mxu0 0.0
        %959 = vmatprep.subr.mxu0 0.0
        %960 = vmatpush1.msra.mxu0 0.0
        %961 = vmatprep.subr.mxu0 0.0
        %962 = vmatpush1.msra.mxu0 0.0
        %963 = vmatprep.subr.mxu0 0.0
        %964 = vmatpush1.msra.mxu0 0.0
        %965 = vmatprep.subr.mxu0 0.0
        %966 = vmatpush1.msra.mxu0 0.0
        %967 = vmatprep.subr.mxu0 0.0
        %968 = vmatpush1.msra.mxu0 0.0
        %969 = vmatprep.subr.mxu0 0.0
        %970 = vmatpush1.msra.mxu0 0.0
        %971 = vmatprep.subr.mxu0 0.0
        %972 = vmatpush1.msra.mxu0 0.0
        %973 = vmatprep.subr.mxu0 0.0
        %974 = vmatpush1.msra.mxu0 0.0
        %975 = vmatprep.subr.mxu0 0.0
        %976 = vmatpush1.msra.mxu0 0.0
        %977 = vmatprep.subr.mxu0 0.0
        %978 = vmatpush1.msra.mxu0 0.0
        %979 = vmatprep.subr.mxu0 0.0
        %980 = vmatpush1.msra.mxu0 0.0
        %981 = vmatprep.subr.mxu0 0.0
        %982 = vmatpush1.msra.mxu0 0.0
        %983 = vmatprep.subr.mxu0 0.0
        %984 = vmatpush1.msra.mxu0 0.0
        %985 = vmatprep.subr.mxu0 0.0
        %986 = vmatpush1.msra.mxu0 %v952
        %987 = vmatprep.subr.mxu0 0.0
        %988 = vmatpush1.msra.mxu0 %v951
        %989 = vmatprep.subr.mxu0 0.0
        %990 = vmatpush2.msra.mxu0 0.0
        %991 = vmatprep.subr.mxu0 0.0
        %992 = vmatpush2.msra.mxu0 0.0
        %993 = vmatprep.subr.mxu0 0.0
        %994 = vmatpush2.msra.mxu0 0.0
        %995 = vmatprep.subr.mxu0 0.0
        %996 = vmatpush2.msra.mxu0 0.0
        %997 = vmatprep.subr.mxu0 0.0
        %998 = vmatpush2.msra.mxu0 0.0
        %999 = vmatprep.subr.mxu0 0.0
        %1000 = vmatpush2.msra.mxu0 0.0
        %1001 = vmatprep.subr.mxu0 0.0
        %1002 = vmatpush2.msra.mxu0 0.0
        %1003 = vmatprep.subr.mxu0 0.0
        %1004 = vmatpush2.msra.mxu0 0.0
        %1005 = vmatprep.subr.mxu0 0.0
        %1006 = vmatpush2.msra.mxu0 0.0
        %1007 = vmatprep.subr.mxu0 0.0
        %1008 = vmatpush2.msra.mxu0 0.0
        %1009 = vmatprep.subr.mxu0 0.0
        %1010 = vmatpush2.msra.mxu0 0.0
        %1011 = vmatprep.subr.mxu0 0.0
        %1012 = vmatpush2.msra.mxu0 0.0
        %1013 = vmatprep.subr.mxu0 0.0
        %1014 = vmatpush2.msra.mxu0 0.0
        %1015 = vmatprep.subr.mxu0 0.0
        %1016 = vmatpush2.msra.mxu0 0.0
        %1017 = vmatprep.subr.mxu0 0.0
        %1018 = vmatpush2.msra.mxu0 0.0
        %1019 = vmatprep.subr.mxu0 0.0
        %1020 = vmatpush2.msra.mxu0 0.0
        %1021 = vmatprep.mubr.f32.mxu0 0.0
        %1022 = vmatmul.mubr.f32.gmra.mxu0 %v955
        %v1023 = vpop.f32.mrf.mxu0
        %v1024 = vadd.f32 0.0, %v1023
        %v1025 = vpop.f32.mrf.mxu0
        %1026 = vdwg.mxu0
        %v1029 = vunpack.c.l.s4 1966171168
        %v1030 = vunpack.c.0.s8 %v1029
        %v1031 = vlaneseq
        %v1032 = vshrl.u32 %v1031, 7
        %v1033 = vsub.s32 %v1030, %v1032
        %v1034 = vrot.slane %v1024, %v1033
        %v1035 = vcombine.high %v1034, %v1034
        %v1037 = vunpack.c.l.s4 1966171168
        %v1038 = vunpack.c.0.s8 %v1037
        %v1039 = vlaneseq
        %v1040 = vshrl.u32 %v1039, 7
        %v1041 = vsub.s32 %v1038, %v1040
        %v1042 = vrot.slane %v1034, %v1041
        %v1044 = vunpack.c.l.s4 1966171168
        %v1045 = vunpack.c.0.s8 %v1044
        %v1046 = vlaneseq
        %v1047 = vshrl.u32 %v1046, 7
        %v1048 = vsub.s32 %v1045, %v1047
        %v1049 = vrot.slane %v1035, %v1048
        %v1050 = vcombine.high %v1042, %v1042
        %v1051 = vcombine.high %v1049, %v1049
        %1056 = vst.msk [vmem:[#allocation3 + $0x5] sm:$0x1] %vm510, %v1042
        %1057 = vst.msk [vmem:[#allocation3 + $0x15] sm:$0x1] %vm510, %v1049
        %1058 = vst.msk [vmem:[#allocation3 + $0x25] sm:$0x1] %vm510, %v1050
        %1059 = vst.msk [vmem:[#allocation3 + $0x35] sm:$0x1] %vm510, %v1051
        %v1060 = vld [vmem:[%s4] sm:$0xff]
        %v1061 = vld [vmem:[%s4 + $0x8] sm:$0xff]
        %1062 = vrot.lane.b32.xlu0 %v401, 32
        %v1063 = vpop.permute.xlu0 %1062
        %v1064 = vsel %vm407, %v1063, 0
        %1066 = vmatprep.subr.mxu0 0.0
        %1067 = vmatpush1.msra.mxu0 0.0
        %1068 = vmatprep.subr.mxu0 0.0
        %1069 = vmatpush1.msra.mxu0 0.0
        %1070 = vmatprep.subr.mxu0 0.0
        %1071 = vmatpush1.msra.mxu0 0.0
        %1072 = vmatprep.subr.mxu0 0.0
        %1073 = vmatpush1.msra.mxu0 0.0
        %1074 = vmatprep.subr.mxu0 0.0
        %1075 = vmatpush1.msra.mxu0 0.0
        %1076 = vmatprep.subr.mxu0 0.0
        %1077 = vmatpush1.msra.mxu0 0.0
        %1078 = vmatprep.subr.mxu0 0.0
        %1079 = vmatpush1.msra.mxu0 0.0
        %1080 = vmatprep.subr.mxu0 0.0
        %1081 = vmatpush1.msra.mxu0 0.0
        %1082 = vmatprep.subr.mxu0 0.0
        %1083 = vmatpush1.msra.mxu0 0.0
        %1084 = vmatprep.subr.mxu0 0.0
        %1085 = vmatpush1.msra.mxu0 0.0
        %1086 = vmatprep.subr.mxu0 0.0
        %1087 = vmatpush1.msra.mxu0 0.0
        %1088 = vmatprep.subr.mxu0 0.0
        %1089 = vmatpush1.msra.mxu0 0.0
        %1090 = vmatprep.subr.mxu0 0.0
        %1091 = vmatpush1.msra.mxu0 0.0
        %1092 = vmatprep.subr.mxu0 0.0
        %1093 = vmatpush1.msra.mxu0 0.0
        %1094 = vmatprep.subr.mxu0 0.0
        %1095 = vmatpush1.msra.mxu0 %v1061
        %1096 = vmatprep.subr.mxu0 0.0
        %1097 = vmatpush1.msra.mxu0 %v1060
        %1098 = vmatprep.subr.mxu0 0.0
        %1099 = vmatpush2.msra.mxu0 0.0
        %1100 = vmatprep.subr.mxu0 0.0
        %1101 = vmatpush2.msra.mxu0 0.0
        %1102 = vmatprep.subr.mxu0 0.0
        %1103 = vmatpush2.msra.mxu0 0.0
        %1104 = vmatprep.subr.mxu0 0.0
        %1105 = vmatpush2.msra.mxu0 0.0
        %1106 = vmatprep.subr.mxu0 0.0
        %1107 = vmatpush2.msra.mxu0 0.0
        %1108 = vmatprep.subr.mxu0 0.0
        %1109 = vmatpush2.msra.mxu0 0.0
        %1110 = vmatprep.subr.mxu0 0.0
        %1111 = vmatpush2.msra.mxu0 0.0
        %1112 = vmatprep.subr.mxu0 0.0
        %1113 = vmatpush2.msra.mxu0 0.0
        %1114 = vmatprep.subr.mxu0 0.0
        %1115 = vmatpush2.msra.mxu0 0.0
        %1116 = vmatprep.subr.mxu0 0.0
        %1117 = vmatpush2.msra.mxu0 0.0
        %1118 = vmatprep.subr.mxu0 0.0
        %1119 = vmatpush2.msra.mxu0 0.0
        %1120 = vmatprep.subr.mxu0 0.0
        %1121 = vmatpush2.msra.mxu0 0.0
        %1122 = vmatprep.subr.mxu0 0.0
        %1123 = vmatpush2.msra.mxu0 0.0
        %1124 = vmatprep.subr.mxu0 0.0
        %1125 = vmatpush2.msra.mxu0 0.0
        %1126 = vmatprep.subr.mxu0 0.0
        %1127 = vmatpush2.msra.mxu0 0.0
        %1128 = vmatprep.subr.mxu0 0.0
        %1129 = vmatpush2.msra.mxu0 0.0
        %1130 = vmatprep.mubr.f32.mxu0 0.0
        %1131 = vmatmul.mubr.f32.gmra.mxu0 %v1064
        %v1132 = vpop.f32.mrf.mxu0
        %v1133 = vadd.f32 0.0, %v1132
        %v1134 = vpop.f32.mrf.mxu0
        %1135 = vdwg.mxu0
        %v1138 = vunpack.c.l.s4 1966171168
        %v1139 = vunpack.c.0.s8 %v1138
        %v1140 = vlaneseq
        %v1141 = vshrl.u32 %v1140, 7
        %v1142 = vsub.s32 %v1139, %v1141
        %v1143 = vrot.slane %v1133, %v1142
        %v1144 = vcombine.high %v1143, %v1143
        %v1146 = vunpack.c.l.s4 1966171168
        %v1147 = vunpack.c.0.s8 %v1146
        %v1148 = vlaneseq
        %v1149 = vshrl.u32 %v1148, 7
        %v1150 = vsub.s32 %v1147, %v1149
        %v1151 = vrot.slane %v1143, %v1150
        %v1153 = vunpack.c.l.s4 1966171168
        %v1154 = vunpack.c.0.s8 %v1153
        %v1155 = vlaneseq
        %v1156 = vshrl.u32 %v1155, 7
        %v1157 = vsub.s32 %v1154, %v1156
        %v1158 = vrot.slane %v1144, %v1157
        %v1159 = vcombine.high %v1151, %v1151
        %v1160 = vcombine.high %v1158, %v1158
        %1165 = vst.msk [vmem:[#allocation3 + $0x6] sm:$0x1] %vm510, %v1151
        %1166 = vst.msk [vmem:[#allocation3 + $0x16] sm:$0x1] %vm510, %v1158
        %1167 = vst.msk [vmem:[#allocation3 + $0x26] sm:$0x1] %vm510, %v1159
        %1168 = vst.msk [vmem:[#allocation3 + $0x36] sm:$0x1] %vm510, %v1160
        %v1169 = vld [vmem:[%s4] sm:$0xff]
        %v1170 = vld [vmem:[%s4 + $0x8] sm:$0xff]
        %1171 = vrot.lane.b32.xlu0 %v401, 16
        %v1172 = vpop.permute.xlu0 %1171
        %v1173 = vsel %vm407, %v1172, 0
        %1175 = vmatprep.subr.mxu0 0.0
        %1176 = vmatpush1.msra.mxu0 0.0
        %1177 = vmatprep.subr.mxu0 0.0
        %1178 = vmatpush1.msra.mxu0 0.0
        %1179 = vmatprep.subr.mxu0 0.0
        %1180 = vmatpush1.msra.mxu0 0.0
        %1181 = vmatprep.subr.mxu0 0.0
        %1182 = vmatpush1.msra.mxu0 0.0
        %1183 = vmatprep.subr.mxu0 0.0
        %1184 = vmatpush1.msra.mxu0 0.0
        %1185 = vmatprep.subr.mxu0 0.0
        %1186 = vmatpush1.msra.mxu0 0.0
        %1187 = vmatprep.subr.mxu0 0.0
        %1188 = vmatpush1.msra.mxu0 0.0
        %1189 = vmatprep.subr.mxu0 0.0
        %1190 = vmatpush1.msra.mxu0 0.0
        %1191 = vmatprep.subr.mxu0 0.0
        %1192 = vmatpush1.msra.mxu0 0.0
        %1193 = vmatprep.subr.mxu0 0.0
        %1194 = vmatpush1.msra.mxu0 0.0
        %1195 = vmatprep.subr.mxu0 0.0
        %1196 = vmatpush1.msra.mxu0 0.0
        %1197 = vmatprep.subr.mxu0 0.0
        %1198 = vmatpush1.msra.mxu0 0.0
        %1199 = vmatprep.subr.mxu0 0.0
        %1200 = vmatpush1.msra.mxu0 0.0
        %1201 = vmatprep.subr.mxu0 0.0
        %1202 = vmatpush1.msra.mxu0 0.0
        %1203 = vmatprep.subr.mxu0 0.0
        %1204 = vmatpush1.msra.mxu0 %v1170
        %1205 = vmatprep.subr.mxu0 0.0
        %1206 = vmatpush1.msra.mxu0 %v1169
        %1207 = vmatprep.subr.mxu0 0.0
        %1208 = vmatpush2.msra.mxu0 0.0
        %1209 = vmatprep.subr.mxu0 0.0
        %1210 = vmatpush2.msra.mxu0 0.0
        %1211 = vmatprep.subr.mxu0 0.0
        %1212 = vmatpush2.msra.mxu0 0.0
        %1213 = vmatprep.subr.mxu0 0.0
        %1214 = vmatpush2.msra.mxu0 0.0
        %1215 = vmatprep.subr.mxu0 0.0
        %1216 = vmatpush2.msra.mxu0 0.0
        %1217 = vmatprep.subr.mxu0 0.0
        %1218 = vmatpush2.msra.mxu0 0.0
        %1219 = vmatprep.subr.mxu0 0.0
        %1220 = vmatpush2.msra.mxu0 0.0
        %1221 = vmatprep.subr.mxu0 0.0
        %1222 = vmatpush2.msra.mxu0 0.0
        %1223 = vmatprep.subr.mxu0 0.0
        %1224 = vmatpush2.msra.mxu0 0.0
        %1225 = vmatprep.subr.mxu0 0.0
        %1226 = vmatpush2.msra.mxu0 0.0
        %1227 = vmatprep.subr.mxu0 0.0
        %1228 = vmatpush2.msra.mxu0 0.0
        %1229 = vmatprep.subr.mxu0 0.0
        %1230 = vmatpush2.msra.mxu0 0.0
        %1231 = vmatprep.subr.mxu0 0.0
        %1232 = vmatpush2.msra.mxu0 0.0
        %1233 = vmatprep.subr.mxu0 0.0
        %1234 = vmatpush2.msra.mxu0 0.0
        %1235 = vmatprep.subr.mxu0 0.0
        %1236 = vmatpush2.msra.mxu0 0.0
        %1237 = vmatprep.subr.mxu0 0.0
        %1238 = vmatpush2.msra.mxu0 0.0
        %1239 = vmatprep.mubr.f32.mxu0 0.0
        %1240 = vmatmul.mubr.f32.gmra.mxu0 %v1173
        %v1241 = vpop.f32.mrf.mxu0
        %v1242 = vadd.f32 0.0, %v1241
        %v1243 = vpop.f32.mrf.mxu0
        %1244 = vdwg.mxu0
        %v1247 = vunpack.c.l.s4 1966171168
        %v1248 = vunpack.c.0.s8 %v1247
        %v1249 = vlaneseq
        %v1250 = vshrl.u32 %v1249, 7
        %v1251 = vsub.s32 %v1248, %v1250
        %v1252 = vrot.slane %v1242, %v1251
        %v1253 = vcombine.high %v1252, %v1252
        %v1255 = vunpack.c.l.s4 1966171168
        %v1256 = vunpack.c.0.s8 %v1255
        %v1257 = vlaneseq
        %v1258 = vshrl.u32 %v1257, 7
        %v1259 = vsub.s32 %v1256, %v1258
        %v1260 = vrot.slane %v1252, %v1259
        %v1262 = vunpack.c.l.s4 1966171168
        %v1263 = vunpack.c.0.s8 %v1262
        %v1264 = vlaneseq
        %v1265 = vshrl.u32 %v1264, 7
        %v1266 = vsub.s32 %v1263, %v1265
        %v1267 = vrot.slane %v1253, %v1266
        %v1268 = vcombine.high %v1260, %v1260
        %v1269 = vcombine.high %v1267, %v1267
        %1274 = vst.msk [vmem:[#allocation3 + $0x7] sm:$0x1] %vm510, %v1260
        %1275 = vst.msk [vmem:[#allocation3 + $0x17] sm:$0x1] %vm510, %v1267
        %1276 = vst.msk [vmem:[#allocation3 + $0x27] sm:$0x1] %vm510, %v1268
        %1277 = vst.msk [vmem:[#allocation3 + $0x37] sm:$0x1] %vm510, %v1269
        %v1278 = vld [vmem:[%s4] sm:$0xff]
        %v1279 = vld [vmem:[%s4 + $0x8] sm:$0xff]
        %v1281 = vsel %vm407, %v403, 0
        %1283 = vmatprep.subr.mxu0 0.0
        %1284 = vmatpush1.msra.mxu0 0.0
        %1285 = vmatprep.subr.mxu0 0.0
        %1286 = vmatpush1.msra.mxu0 0.0
        %1287 = vmatprep.subr.mxu0 0.0
        %1288 = vmatpush1.msra.mxu0 0.0
        %1289 = vmatprep.subr.mxu0 0.0
        %1290 = vmatpush1.msra.mxu0 0.0
        %1291 = vmatprep.subr.mxu0 0.0
        %1292 = vmatpush1.msra.mxu0 0.0
        %1293 = vmatprep.subr.mxu0 0.0
        %1294 = vmatpush1.msra.mxu0 0.0
        %1295 = vmatprep.subr.mxu0 0.0
        %1296 = vmatpush1.msra.mxu0 0.0
        %1297 = vmatprep.subr.mxu0 0.0
        %1298 = vmatpush1.msra.mxu0 0.0
        %1299 = vmatprep.subr.mxu0 0.0
        %1300 = vmatpush1.msra.mxu0 0.0
        %1301 = vmatprep.subr.mxu0 0.0
        %1302 = vmatpush1.msra.mxu0 0.0
        %1303 = vmatprep.subr.mxu0 0.0
        %1304 = vmatpush1.msra.mxu0 0.0
        %1305 = vmatprep.subr.mxu0 0.0
        %1306 = vmatpush1.msra.mxu0 0.0
        %1307 = vmatprep.subr.mxu0 0.0
        %1308 = vmatpush1.msra.mxu0 0.0
        %1309 = vmatprep.subr.mxu0 0.0
        %1310 = vmatpush1.msra.mxu0 0.0
        %1311 = vmatprep.subr.mxu0 0.0
        %1312 = vmatpush1.msra.mxu0 %v1279
        %1313 = vmatprep.subr.mxu0 0.0
        %1314 = vmatpush1.msra.mxu0 %v1278
        %1315 = vmatprep.subr.mxu0 0.0
        %1316 = vmatpush2.msra.mxu0 0.0
        %1317 = vmatprep.subr.mxu0 0.0
        %1318 = vmatpush2.msra.mxu0 0.0
        %1319 = vmatprep.subr.mxu0 0.0
        %1320 = vmatpush2.msra.mxu0 0.0
        %1321 = vmatprep.subr.mxu0 0.0
        %1322 = vmatpush2.msra.mxu0 0.0
        %1323 = vmatprep.subr.mxu0 0.0
        %1324 = vmatpush2.msra.mxu0 0.0
        %1325 = vmatprep.subr.mxu0 0.0
        %1326 = vmatpush2.msra.mxu0 0.0
        %1327 = vmatprep.subr.mxu0 0.0
        %1328 = vmatpush2.msra.mxu0 0.0
        %1329 = vmatprep.subr.mxu0 0.0
        %1330 = vmatpush2.msra.mxu0 0.0
        %1331 = vmatprep.subr.mxu0 0.0
        %1332 = vmatpush2.msra.mxu0 0.0
        %1333 = vmatprep.subr.mxu0 0.0
        %1334 = vmatpush2.msra.mxu0 0.0
        %1335 = vmatprep.subr.mxu0 0.0
        %1336 = vmatpush2.msra.mxu0 0.0
        %1337 = vmatprep.subr.mxu0 0.0
        %1338 = vmatpush2.msra.mxu0 0.0
        %1339 = vmatprep.subr.mxu0 0.0
        %1340 = vmatpush2.msra.mxu0 0.0
        %1341 = vmatprep.subr.mxu0 0.0
        %1342 = vmatpush2.msra.mxu0 0.0
        %1343 = vmatprep.subr.mxu0 0.0
        %1344 = vmatpush2.msra.mxu0 0.0
        %1345 = vmatprep.subr.mxu0 0.0
        %1346 = vmatpush2.msra.mxu0 0.0
        %1347 = vmatprep.mubr.f32.mxu0 0.0
        %1348 = vmatmul.mubr.f32.gmra.mxu0 %v1281
        %v1349 = vpop.f32.mrf.mxu0
        %v1350 = vadd.f32 0.0, %v1349
        %v1351 = vpop.f32.mrf.mxu0
        %1352 = vdwg.mxu0
        %v1355 = vunpack.c.l.s4 1966171168
        %v1356 = vunpack.c.0.s8 %v1355
        %v1357 = vlaneseq
        %v1358 = vshrl.u32 %v1357, 7
        %v1359 = vsub.s32 %v1356, %v1358
        %v1360 = vrot.slane %v1350, %v1359
        %v1361 = vcombine.high %v1360, %v1360
        %v1363 = vunpack.c.l.s4 1966171168
        %v1364 = vunpack.c.0.s8 %v1363
        %v1365 = vlaneseq
        %v1366 = vshrl.u32 %v1365, 7
        %v1367 = vsub.s32 %v1364, %v1366
        %v1368 = vrot.slane %v1360, %v1367
        %v1370 = vunpack.c.l.s4 1966171168
        %v1371 = vunpack.c.0.s8 %v1370
        %v1372 = vlaneseq
        %v1373 = vshrl.u32 %v1372, 7
        %v1374 = vsub.s32 %v1371, %v1373
        %v1375 = vrot.slane %v1361, %v1374
        %v1376 = vcombine.high %v1368, %v1368
        %v1377 = vcombine.high %v1375, %v1375
        %1382 = vst.msk [vmem:[#allocation3 + $0x8] sm:$0x1] %vm510, %v1368
        %1383 = vst.msk [vmem:[#allocation3 + $0x18] sm:$0x1] %vm510, %v1375
        %1384 = vst.msk [vmem:[#allocation3 + $0x28] sm:$0x1] %vm510, %v1376
        %1385 = vst.msk [vmem:[#allocation3 + $0x38] sm:$0x1] %vm510, %v1377
        %v1386 = vld [vmem:[%s4] sm:$0xff]
        %v1387 = vld [vmem:[%s4 + $0x8] sm:$0xff]
        %1388 = vrot.lane.b32.xlu0 %v403, 112
        %v1389 = vpop.permute.xlu0 %1388
        %v1390 = vsel %vm407, %v1389, 0
        %1392 = vmatprep.subr.mxu0 0.0
        %1393 = vmatpush1.msra.mxu0 0.0
        %1394 = vmatprep.subr.mxu0 0.0
        %1395 = vmatpush1.msra.mxu0 0.0
        %1396 = vmatprep.subr.mxu0 0.0
        %1397 = vmatpush1.msra.mxu0 0.0
        %1398 = vmatprep.subr.mxu0 0.0
        %1399 = vmatpush1.msra.mxu0 0.0
        %1400 = vmatprep.subr.mxu0 0.0
        %1401 = vmatpush1.msra.mxu0 0.0
        %1402 = vmatprep.subr.mxu0 0.0
        %1403 = vmatpush1.msra.mxu0 0.0
        %1404 = vmatprep.subr.mxu0 0.0
        %1405 = vmatpush1.msra.mxu0 0.0
        %1406 = vmatprep.subr.mxu0 0.0
        %1407 = vmatpush1.msra.mxu0 0.0
        %1408 = vmatprep.subr.mxu0 0.0
        %1409 = vmatpush1.msra.mxu0 0.0
        %1410 = vmatprep.subr.mxu0 0.0
        %1411 = vmatpush1.msra.mxu0 0.0
        %1412 = vmatprep.subr.mxu0 0.0
        %1413 = vmatpush1.msra.mxu0 0.0
        %1414 = vmatprep.subr.mxu0 0.0
        %1415 = vmatpush1.msra.mxu0 0.0
        %1416 = vmatprep.subr.mxu0 0.0
        %1417 = vmatpush1.msra.mxu0 0.0
        %1418 = vmatprep.subr.mxu0 0.0
        %1419 = vmatpush1.msra.mxu0 0.0
        %1420 = vmatprep.subr.mxu0 0.0
        %1421 = vmatpush1.msra.mxu0 %v1387
        %1422 = vmatprep.subr.mxu0 0.0
        %1423 = vmatpush1.msra.mxu0 %v1386
        %1424 = vmatprep.subr.mxu0 0.0
        %1425 = vmatpush2.msra.mxu0 0.0
        %1426 = vmatprep.subr.mxu0 0.0
        %1427 = vmatpush2.msra.mxu0 0.0
        %1428 = vmatprep.subr.mxu0 0.0
        %1429 = vmatpush2.msra.mxu0 0.0
        %1430 = vmatprep.subr.mxu0 0.0
        %1431 = vmatpush2.msra.mxu0 0.0
        %1432 = vmatprep.subr.mxu0 0.0
        %1433 = vmatpush2.msra.mxu0 0.0
        %1434 = vmatprep.subr.mxu0 0.0
        %1435 = vmatpush2.msra.mxu0 0.0
        %1436 = vmatprep.subr.mxu0 0.0
        %1437 = vmatpush2.msra.mxu0 0.0
        %1438 = vmatprep.subr.mxu0 0.0
        %1439 = vmatpush2.msra.mxu0 0.0
        %1440 = vmatprep.subr.mxu0 0.0
        %1441 = vmatpush2.msra.mxu0 0.0
        %1442 = vmatprep.subr.mxu0 0.0
        %1443 = vmatpush2.msra.mxu0 0.0
        %1444 = vmatprep.subr.mxu0 0.0
        %1445 = vmatpush2.msra.mxu0 0.0
        %1446 = vmatprep.subr.mxu0 0.0
        %1447 = vmatpush2.msra.mxu0 0.0
        %1448 = vmatprep.subr.mxu0 0.0
        %1449 = vmatpush2.msra.mxu0 0.0
        %1450 = vmatprep.subr.mxu0 0.0
        %1451 = vmatpush2.msra.mxu0 0.0
        %1452 = vmatprep.subr.mxu0 0.0
        %1453 = vmatpush2.msra.mxu0 0.0
        %1454 = vmatprep.subr.mxu0 0.0
        %1455 = vmatpush2.msra.mxu0 0.0
        %1456 = vmatprep.mubr.f32.mxu0 0.0
        %1457 = vmatmul.mubr.f32.gmra.mxu0 %v1390
        %v1458 = vpop.f32.mrf.mxu0
        %v1459 = vadd.f32 0.0, %v1458
        %v1460 = vpop.f32.mrf.mxu0
        %1461 = vdwg.mxu0
        %v1464 = vunpack.c.l.s4 1966171168
        %v1465 = vunpack.c.0.s8 %v1464
        %v1466 = vlaneseq
        %v1467 = vshrl.u32 %v1466, 7
        %v1468 = vsub.s32 %v1465, %v1467
        %v1469 = vrot.slane %v1459, %v1468
        %v1470 = vcombine.high %v1469, %v1469
        %v1472 = vunpack.c.l.s4 1966171168
        %v1473 = vunpack.c.0.s8 %v1472
        %v1474 = vlaneseq
        %v1475 = vshrl.u32 %v1474, 7
        %v1476 = vsub.s32 %v1473, %v1475
        %v1477 = vrot.slane %v1469, %v1476
        %v1479 = vunpack.c.l.s4 1966171168
        %v1480 = vunpack.c.0.s8 %v1479
        %v1481 = vlaneseq
        %v1482 = vshrl.u32 %v1481, 7
        %v1483 = vsub.s32 %v1480, %v1482
        %v1484 = vrot.slane %v1470, %v1483
        %v1485 = vcombine.high %v1477, %v1477
        %v1486 = vcombine.high %v1484, %v1484
        %1491 = vst.msk [vmem:[#allocation3 + $0x9] sm:$0x1] %vm510, %v1477
        %1492 = vst.msk [vmem:[#allocation3 + $0x19] sm:$0x1] %vm510, %v1484
        %1493 = vst.msk [vmem:[#allocation3 + $0x29] sm:$0x1] %vm510, %v1485
        %1494 = vst.msk [vmem:[#allocation3 + $0x39] sm:$0x1] %vm510, %v1486
        %v1495 = vld [vmem:[%s4] sm:$0xff]
        %v1496 = vld [vmem:[%s4 + $0x8] sm:$0xff]
        %1497 = vrot.lane.b32.xlu0 %v403, 96
        %v1498 = vpop.permute.xlu0 %1497
        %v1499 = vsel %vm407, %v1498, 0
        %1501 = vmatprep.subr.mxu0 0.0
        %1502 = vmatpush1.msra.mxu0 0.0
        %1503 = vmatprep.subr.mxu0 0.0
        %1504 = vmatpush1.msra.mxu0 0.0
        %1505 = vmatprep.subr.mxu0 0.0
        %1506 = vmatpush1.msra.mxu0 0.0
        %1507 = vmatprep.subr.mxu0 0.0
        %1508 = vmatpush1.msra.mxu0 0.0
        %1509 = vmatprep.subr.mxu0 0.0
        %1510 = vmatpush1.msra.mxu0 0.0
        %1511 = vmatprep.subr.mxu0 0.0
        %1512 = vmatpush1.msra.mxu0 0.0
        %1513 = vmatprep.subr.mxu0 0.0
        %1514 = vmatpush1.msra.mxu0 0.0
        %1515 = vmatprep.subr.mxu0 0.0
        %1516 = vmatpush1.msra.mxu0 0.0
        %1517 = vmatprep.subr.mxu0 0.0
        %1518 = vmatpush1.msra.mxu0 0.0
        %1519 = vmatprep.subr.mxu0 0.0
        %1520 = vmatpush1.msra.mxu0 0.0
        %1521 = vmatprep.subr.mxu0 0.0
        %1522 = vmatpush1.msra.mxu0 0.0
        %1523 = vmatprep.subr.mxu0 0.0
        %1524 = vmatpush1.msra.mxu0 0.0
        %1525 = vmatprep.subr.mxu0 0.0
        %1526 = vmatpush1.msra.mxu0 0.0
        %1527 = vmatprep.subr.mxu0 0.0
        %1528 = vmatpush1.msra.mxu0 0.0
        %1529 = vmatprep.subr.mxu0 0.0
        %1530 = vmatpush1.msra.mxu0 %v1496
        %1531 = vmatprep.subr.mxu0 0.0
        %1532 = vmatpush1.msra.mxu0 %v1495
        %1533 = vmatprep.subr.mxu0 0.0
        %1534 = vmatpush2.msra.mxu0 0.0
        %1535 = vmatprep.subr.mxu0 0.0
        %1536 = vmatpush2.msra.mxu0 0.0
        %1537 = vmatprep.subr.mxu0 0.0
        %1538 = vmatpush2.msra.mxu0 0.0
        %1539 = vmatprep.subr.mxu0 0.0
        %1540 = vmatpush2.msra.mxu0 0.0
        %1541 = vmatprep.subr.mxu0 0.0
        %1542 = vmatpush2.msra.mxu0 0.0
        %1543 = vmatprep.subr.mxu0 0.0
        %1544 = vmatpush2.msra.mxu0 0.0
        %1545 = vmatprep.subr.mxu0 0.0
        %1546 = vmatpush2.msra.mxu0 0.0
        %1547 = vmatprep.subr.mxu0 0.0
        %1548 = vmatpush2.msra.mxu0 0.0
        %1549 = vmatprep.subr.mxu0 0.0
        %1550 = vmatpush2.msra.mxu0 0.0
        %1551 = vmatprep.subr.mxu0 0.0
        %1552 = vmatpush2.msra.mxu0 0.0
        %1553 = vmatprep.subr.mxu0 0.0
        %1554 = vmatpush2.msra.mxu0 0.0
        %1555 = vmatprep.subr.mxu0 0.0
        %1556 = vmatpush2.msra.mxu0 0.0
        %1557 = vmatprep.subr.mxu0 0.0
        %1558 = vmatpush2.msra.mxu0 0.0
        %1559 = vmatprep.subr.mxu0 0.0
        %1560 = vmatpush2.msra.mxu0 0.0
        %1561 = vmatprep.subr.mxu0 0.0
        %1562 = vmatpush2.msra.mxu0 0.0
        %1563 = vmatprep.subr.mxu0 0.0
        %1564 = vmatpush2.msra.mxu0 0.0
        %1565 = vmatprep.mubr.f32.mxu0 0.0
        %1566 = vmatmul.mubr.f32.gmra.mxu0 %v1499
        %v1567 = vpop.f32.mrf.mxu0
        %v1568 = vadd.f32 0.0, %v1567
        %v1569 = vpop.f32.mrf.mxu0
        %1570 = vdwg.mxu0
        %v1573 = vunpack.c.l.s4 1966171168
        %v1574 = vunpack.c.0.s8 %v1573
        %v1575 = vlaneseq
        %v1576 = vshrl.u32 %v1575, 7
        %v1577 = vsub.s32 %v1574, %v1576
        %v1578 = vrot.slane %v1568, %v1577
        %v1579 = vcombine.high %v1578, %v1578
        %v1581 = vunpack.c.l.s4 1966171168
        %v1582 = vunpack.c.0.s8 %v1581
        %v1583 = vlaneseq
        %v1584 = vshrl.u32 %v1583, 7
        %v1585 = vsub.s32 %v1582, %v1584
        %v1586 = vrot.slane %v1578, %v1585
        %v1588 = vunpack.c.l.s4 1966171168
        %v1589 = vunpack.c.0.s8 %v1588
        %v1590 = vlaneseq
        %v1591 = vshrl.u32 %v1590, 7
        %v1592 = vsub.s32 %v1589, %v1591
        %v1593 = vrot.slane %v1579, %v1592
        %v1594 = vcombine.high %v1586, %v1586
        %v1595 = vcombine.high %v1593, %v1593
        %1600 = vst.msk [vmem:[#allocation3 + $0xa] sm:$0x1] %vm510, %v1586
        %1601 = vst.msk [vmem:[#allocation3 + $0x1a] sm:$0x1] %vm510, %v1593
        %1602 = vst.msk [vmem:[#allocation3 + $0x2a] sm:$0x1] %vm510, %v1594
        %1603 = vst.msk [vmem:[#allocation3 + $0x3a] sm:$0x1] %vm510, %v1595
        %v1604 = vld [vmem:[%s4] sm:$0xff]
        %v1605 = vld [vmem:[%s4 + $0x8] sm:$0xff]
        %1606 = vrot.lane.b32.xlu0 %v403, 80
        %v1607 = vpop.permute.xlu0 %1606
        %v1608 = vsel %vm407, %v1607, 0
        %1610 = vmatprep.subr.mxu0 0.0
        %1611 = vmatpush1.msra.mxu0 0.0
        %1612 = vmatprep.subr.mxu0 0.0
        %1613 = vmatpush1.msra.mxu0 0.0
        %1614 = vmatprep.subr.mxu0 0.0
        %1615 = vmatpush1.msra.mxu0 0.0
        %1616 = vmatprep.subr.mxu0 0.0
        %1617 = vmatpush1.msra.mxu0 0.0
        %1618 = vmatprep.subr.mxu0 0.0
        %1619 = vmatpush1.msra.mxu0 0.0
        %1620 = vmatprep.subr.mxu0 0.0
        %1621 = vmatpush1.msra.mxu0 0.0
        %1622 = vmatprep.subr.mxu0 0.0
        %1623 = vmatpush1.msra.mxu0 0.0
        %1624 = vmatprep.subr.mxu0 0.0
        %1625 = vmatpush1.msra.mxu0 0.0
        %1626 = vmatprep.subr.mxu0 0.0
        %1627 = vmatpush1.msra.mxu0 0.0
        %1628 = vmatprep.subr.mxu0 0.0
        %1629 = vmatpush1.msra.mxu0 0.0
        %1630 = vmatprep.subr.mxu0 0.0
        %1631 = vmatpush1.msra.mxu0 0.0
        %1632 = vmatprep.subr.mxu0 0.0
        %1633 = vmatpush1.msra.mxu0 0.0
        %1634 = vmatprep.subr.mxu0 0.0
        %1635 = vmatpush1.msra.mxu0 0.0
        %1636 = vmatprep.subr.mxu0 0.0
        %1637 = vmatpush1.msra.mxu0 0.0
        %1638 = vmatprep.subr.mxu0 0.0
        %1639 = vmatpush1.msra.mxu0 %v1605
        %1640 = vmatprep.subr.mxu0 0.0
        %1641 = vmatpush1.msra.mxu0 %v1604
        %1642 = vmatprep.subr.mxu0 0.0
        %1643 = vmatpush2.msra.mxu0 0.0
        %1644 = vmatprep.subr.mxu0 0.0
        %1645 = vmatpush2.msra.mxu0 0.0
        %1646 = vmatprep.subr.mxu0 0.0
        %1647 = vmatpush2.msra.mxu0 0.0
        %1648 = vmatprep.subr.mxu0 0.0
        %1649 = vmatpush2.msra.mxu0 0.0
        %1650 = vmatprep.subr.mxu0 0.0
        %1651 = vmatpush2.msra.mxu0 0.0
        %1652 = vmatprep.subr.mxu0 0.0
        %1653 = vmatpush2.msra.mxu0 0.0
        %1654 = vmatprep.subr.mxu0 0.0
        %1655 = vmatpush2.msra.mxu0 0.0
        %1656 = vmatprep.subr.mxu0 0.0
        %1657 = vmatpush2.msra.mxu0 0.0
        %1658 = vmatprep.subr.mxu0 0.0
        %1659 = vmatpush2.msra.mxu0 0.0
        %1660 = vmatprep.subr.mxu0 0.0
        %1661 = vmatpush2.msra.mxu0 0.0
        %1662 = vmatprep.subr.mxu0 0.0
        %1663 = vmatpush2.msra.mxu0 0.0
        %1664 = vmatprep.subr.mxu0 0.0
        %1665 = vmatpush2.msra.mxu0 0.0
        %1666 = vmatprep.subr.mxu0 0.0
        %1667 = vmatpush2.msra.mxu0 0.0
        %1668 = vmatprep.subr.mxu0 0.0
        %1669 = vmatpush2.msra.mxu0 0.0
        %1670 = vmatprep.subr.mxu0 0.0
        %1671 = vmatpush2.msra.mxu0 0.0
        %1672 = vmatprep.subr.mxu0 0.0
        %1673 = vmatpush2.msra.mxu0 0.0
        %1674 = vmatprep.mubr.f32.mxu0 0.0
        %1675 = vmatmul.mubr.f32.gmra.mxu0 %v1608
        %v1676 = vpop.f32.mrf.mxu0
        %v1677 = vadd.f32 0.0, %v1676
        %v1678 = vpop.f32.mrf.mxu0
        %1679 = vdwg.mxu0
        %v1682 = vunpack.c.l.s4 1966171168
        %v1683 = vunpack.c.0.s8 %v1682
        %v1684 = vlaneseq
        %v1685 = vshrl.u32 %v1684, 7
        %v1686 = vsub.s32 %v1683, %v1685
        %v1687 = vrot.slane %v1677, %v1686
        %v1688 = vcombine.high %v1687, %v1687
        %v1690 = vunpack.c.l.s4 1966171168
        %v1691 = vunpack.c.0.s8 %v1690
        %v1692 = vlaneseq
        %v1693 = vshrl.u32 %v1692, 7
        %v1694 = vsub.s32 %v1691, %v1693
        %v1695 = vrot.slane %v1687, %v1694
        %v1697 = vunpack.c.l.s4 1966171168
        %v1698 = vunpack.c.0.s8 %v1697
        %v1699 = vlaneseq
        %v1700 = vshrl.u32 %v1699, 7
        %v1701 = vsub.s32 %v1698, %v1700
        %v1702 = vrot.slane %v1688, %v1701
        %v1703 = vcombine.high %v1695, %v1695
        %v1704 = vcombine.high %v1702, %v1702
        %1709 = vst.msk [vmem:[#allocation3 + $0xb] sm:$0x1] %vm510, %v1695
        %1710 = vst.msk [vmem:[#allocation3 + $0x1b] sm:$0x1] %vm510, %v1702
        %1711 = vst.msk [vmem:[#allocation3 + $0x2b] sm:$0x1] %vm510, %v1703
        %1712 = vst.msk [vmem:[#allocation3 + $0x3b] sm:$0x1] %vm510, %v1704
        %v1713 = vld [vmem:[%s4] sm:$0xff]
        %v1714 = vld [vmem:[%s4 + $0x8] sm:$0xff]
        %1715 = vrot.lane.b32.xlu0 %v403, 64
        %v1716 = vpop.permute.xlu0 %1715
        %v1717 = vsel %vm407, %v1716, 0
        %1719 = vmatprep.subr.mxu0 0.0
        %1720 = vmatpush1.msra.mxu0 0.0
        %1721 = vmatprep.subr.mxu0 0.0
        %1722 = vmatpush1.msra.mxu0 0.0
        %1723 = vmatprep.subr.mxu0 0.0
        %1724 = vmatpush1.msra.mxu0 0.0
        %1725 = vmatprep.subr.mxu0 0.0
        %1726 = vmatpush1.msra.mxu0 0.0
        %1727 = vmatprep.subr.mxu0 0.0
        %1728 = vmatpush1.msra.mxu0 0.0
        %1729 = vmatprep.subr.mxu0 0.0
        %1730 = vmatpush1.msra.mxu0 0.0
        %1731 = vmatprep.subr.mxu0 0.0
        %1732 = vmatpush1.msra.mxu0 0.0
        %1733 = vmatprep.subr.mxu0 0.0
        %1734 = vmatpush1.msra.mxu0 0.0
        %1735 = vmatprep.subr.mxu0 0.0
        %1736 = vmatpush1.msra.mxu0 0.0
        %1737 = vmatprep.subr.mxu0 0.0
        %1738 = vmatpush1.msra.mxu0 0.0
        %1739 = vmatprep.subr.mxu0 0.0
        %1740 = vmatpush1.msra.mxu0 0.0
        %1741 = vmatprep.subr.mxu0 0.0
        %1742 = vmatpush1.msra.mxu0 0.0
        %1743 = vmatprep.subr.mxu0 0.0
        %1744 = vmatpush1.msra.mxu0 0.0
        %1745 = vmatprep.subr.mxu0 0.0
        %1746 = vmatpush1.msra.mxu0 0.0
        %1747 = vmatprep.subr.mxu0 0.0
        %1748 = vmatpush1.msra.mxu0 %v1714
        %1749 = vmatprep.subr.mxu0 0.0
        %1750 = vmatpush1.msra.mxu0 %v1713
        %1751 = vmatprep.subr.mxu0 0.0
        %1752 = vmatpush2.msra.mxu0 0.0
        %1753 = vmatprep.subr.mxu0 0.0
        %1754 = vmatpush2.msra.mxu0 0.0
        %1755 = vmatprep.subr.mxu0 0.0
        %1756 = vmatpush2.msra.mxu0 0.0
        %1757 = vmatprep.subr.mxu0 0.0
        %1758 = vmatpush2.msra.mxu0 0.0
        %1759 = vmatprep.subr.mxu0 0.0
        %1760 = vmatpush2.msra.mxu0 0.0
        %1761 = vmatprep.subr.mxu0 0.0
        %1762 = vmatpush2.msra.mxu0 0.0
        %1763 = vmatprep.subr.mxu0 0.0
        %1764 = vmatpush2.msra.mxu0 0.0
        %1765 = vmatprep.subr.mxu0 0.0
        %1766 = vmatpush2.msra.mxu0 0.0
        %1767 = vmatprep.subr.mxu0 0.0
        %1768 = vmatpush2.msra.mxu0 0.0
        %1769 = vmatprep.subr.mxu0 0.0
        %1770 = vmatpush2.msra.mxu0 0.0
        %1771 = vmatprep.subr.mxu0 0.0
        %1772 = vmatpush2.msra.mxu0 0.0
        %1773 = vmatprep.subr.mxu0 0.0
        %1774 = vmatpush2.msra.mxu0 0.0
        %1775 = vmatprep.subr.mxu0 0.0
        %1776 = vmatpush2.msra.mxu0 0.0
        %1777 = vmatprep.subr.mxu0 0.0
        %1778 = vmatpush2.msra.mxu0 0.0
        %1779 = vmatprep.subr.mxu0 0.0
        %1780 = vmatpush2.msra.mxu0 0.0
        %1781 = vmatprep.subr.mxu0 0.0
        %1782 = vmatpush2.msra.mxu0 0.0
        %1783 = vmatprep.mubr.f32.mxu0 0.0
        %1784 = vmatmul.mubr.f32.gmra.mxu0 %v1717
        %v1785 = vpop.f32.mrf.mxu0
        %v1786 = vadd.f32 0.0, %v1785
        %v1787 = vpop.f32.mrf.mxu0
        %1788 = vdwg.mxu0
        %v1791 = vunpack.c.l.s4 1966171168
        %v1792 = vunpack.c.0.s8 %v1791
        %v1793 = vlaneseq
        %v1794 = vshrl.u32 %v1793, 7
        %v1795 = vsub.s32 %v1792, %v1794
        %v1796 = vrot.slane %v1786, %v1795
        %v1797 = vcombine.high %v1796, %v1796
        %v1799 = vunpack.c.l.s4 1966171168
        %v1800 = vunpack.c.0.s8 %v1799
        %v1801 = vlaneseq
        %v1802 = vshrl.u32 %v1801, 7
        %v1803 = vsub.s32 %v1800, %v1802
        %v1804 = vrot.slane %v1796, %v1803
        %v1806 = vunpack.c.l.s4 1966171168
        %v1807 = vunpack.c.0.s8 %v1806
        %v1808 = vlaneseq
        %v1809 = vshrl.u32 %v1808, 7
        %v1810 = vsub.s32 %v1807, %v1809
        %v1811 = vrot.slane %v1797, %v1810
        %v1812 = vcombine.high %v1804, %v1804
        %v1813 = vcombine.high %v1811, %v1811
        %1818 = vst.msk [vmem:[#allocation3 + $0xc] sm:$0x1] %vm510, %v1804
        %1819 = vst.msk [vmem:[#allocation3 + $0x1c] sm:$0x1] %vm510, %v1811
        %1820 = vst.msk [vmem:[#allocation3 + $0x2c] sm:$0x1] %vm510, %v1812
        %1821 = vst.msk [vmem:[#allocation3 + $0x3c] sm:$0x1] %vm510, %v1813
        %v1822 = vld [vmem:[%s4] sm:$0xff]
        %v1823 = vld [vmem:[%s4 + $0x8] sm:$0xff]
        %1824 = vrot.lane.b32.xlu0 %v403, 48
        %v1825 = vpop.permute.xlu0 %1824
        %v1826 = vsel %vm407, %v1825, 0
        %1828 = vmatprep.subr.mxu0 0.0
        %1829 = vmatpush1.msra.mxu0 0.0
        %1830 = vmatprep.subr.mxu0 0.0
        %1831 = vmatpush1.msra.mxu0 0.0
        %1832 = vmatprep.subr.mxu0 0.0
        %1833 = vmatpush1.msra.mxu0 0.0
        %1834 = vmatprep.subr.mxu0 0.0
        %1835 = vmatpush1.msra.mxu0 0.0
        %1836 = vmatprep.subr.mxu0 0.0
        %1837 = vmatpush1.msra.mxu0 0.0
        %1838 = vmatprep.subr.mxu0 0.0
        %1839 = vmatpush1.msra.mxu0 0.0
        %1840 = vmatprep.subr.mxu0 0.0
        %1841 = vmatpush1.msra.mxu0 0.0
        %1842 = vmatprep.subr.mxu0 0.0
        %1843 = vmatpush1.msra.mxu0 0.0
        %1844 = vmatprep.subr.mxu0 0.0
        %1845 = vmatpush1.msra.mxu0 0.0
        %1846 = vmatprep.subr.mxu0 0.0
        %1847 = vmatpush1.msra.mxu0 0.0
        %1848 = vmatprep.subr.mxu0 0.0
        %1849 = vmatpush1.msra.mxu0 0.0
        %1850 = vmatprep.subr.mxu0 0.0
        %1851 = vmatpush1.msra.mxu0 0.0
        %1852 = vmatprep.subr.mxu0 0.0
        %1853 = vmatpush1.msra.mxu0 0.0
        %1854 = vmatprep.subr.mxu0 0.0
        %1855 = vmatpush1.msra.mxu0 0.0
        %1856 = vmatprep.subr.mxu0 0.0
        %1857 = vmatpush1.msra.mxu0 %v1823
        %1858 = vmatprep.subr.mxu0 0.0
        %1859 = vmatpush1.msra.mxu0 %v1822
        %1860 = vmatprep.subr.mxu0 0.0
        %1861 = vmatpush2.msra.mxu0 0.0
        %1862 = vmatprep.subr.mxu0 0.0
        %1863 = vmatpush2.msra.mxu0 0.0
        %1864 = vmatprep.subr.mxu0 0.0
        %1865 = vmatpush2.msra.mxu0 0.0
        %1866 = vmatprep.subr.mxu0 0.0
        %1867 = vmatpush2.msra.mxu0 0.0
        %1868 = vmatprep.subr.mxu0 0.0
        %1869 = vmatpush2.msra.mxu0 0.0
        %1870 = vmatprep.subr.mxu0 0.0
        %1871 = vmatpush2.msra.mxu0 0.0
        %1872 = vmatprep.subr.mxu0 0.0
        %1873 = vmatpush2.msra.mxu0 0.0
        %1874 = vmatprep.subr.mxu0 0.0
        %1875 = vmatpush2.msra.mxu0 0.0
        %1876 = vmatprep.subr.mxu0 0.0
        %1877 = vmatpush2.msra.mxu0 0.0
        %1878 = vmatprep.subr.mxu0 0.0
        %1879 = vmatpush2.msra.mxu0 0.0
        %1880 = vmatprep.subr.mxu0 0.0
        %1881 = vmatpush2.msra.mxu0 0.0
        %1882 = vmatprep.subr.mxu0 0.0
        %1883 = vmatpush2.msra.mxu0 0.0
        %1884 = vmatprep.subr.mxu0 0.0
        %1885 = vmatpush2.msra.mxu0 0.0
        %1886 = vmatprep.subr.mxu0 0.0
        %1887 = vmatpush2.msra.mxu0 0.0
        %1888 = vmatprep.subr.mxu0 0.0
        %1889 = vmatpush2.msra.mxu0 0.0
        %1890 = vmatprep.subr.mxu0 0.0
        %1891 = vmatpush2.msra.mxu0 0.0
        %1892 = vmatprep.mubr.f32.mxu0 0.0
        %1893 = vmatmul.mubr.f32.gmra.mxu0 %v1826
        %v1894 = vpop.f32.mrf.mxu0
        %v1895 = vadd.f32 0.0, %v1894
        %v1896 = vpop.f32.mrf.mxu0
        %1897 = vdwg.mxu0
        %v1900 = vunpack.c.l.s4 1966171168
        %v1901 = vunpack.c.0.s8 %v1900
        %v1902 = vlaneseq
        %v1903 = vshrl.u32 %v1902, 7
        %v1904 = vsub.s32 %v1901, %v1903
        %v1905 = vrot.slane %v1895, %v1904
        %v1906 = vcombine.high %v1905, %v1905
        %v1908 = vunpack.c.l.s4 1966171168
        %v1909 = vunpack.c.0.s8 %v1908
        %v1910 = vlaneseq
        %v1911 = vshrl.u32 %v1910, 7
        %v1912 = vsub.s32 %v1909, %v1911
        %v1913 = vrot.slane %v1905, %v1912
        %v1915 = vunpack.c.l.s4 1966171168
        %v1916 = vunpack.c.0.s8 %v1915
        %v1917 = vlaneseq
        %v1918 = vshrl.u32 %v1917, 7
        %v1919 = vsub.s32 %v1916, %v1918
        %v1920 = vrot.slane %v1906, %v1919
        %v1921 = vcombine.high %v1913, %v1913
        %v1922 = vcombine.high %v1920, %v1920
        %1927 = vst.msk [vmem:[#allocation3 + $0xd] sm:$0x1] %vm510, %v1913
        %1928 = vst.msk [vmem:[#allocation3 + $0x1d] sm:$0x1] %vm510, %v1920
        %1929 = vst.msk [vmem:[#allocation3 + $0x2d] sm:$0x1] %vm510, %v1921
        %1930 = vst.msk [vmem:[#allocation3 + $0x3d] sm:$0x1] %vm510, %v1922
        %v1931 = vld [vmem:[%s4] sm:$0xff]
        %v1932 = vld [vmem:[%s4 + $0x8] sm:$0xff]
        %1933 = vrot.lane.b32.xlu0 %v403, 32
        %v1934 = vpop.permute.xlu0 %1933
        %v1935 = vsel %vm407, %v1934, 0
        %1937 = vmatprep.subr.mxu0 0.0
        %1938 = vmatpush1.msra.mxu0 0.0
        %1939 = vmatprep.subr.mxu0 0.0
        %1940 = vmatpush1.msra.mxu0 0.0
        %1941 = vmatprep.subr.mxu0 0.0
        %1942 = vmatpush1.msra.mxu0 0.0
        %1943 = vmatprep.subr.mxu0 0.0
        %1944 = vmatpush1.msra.mxu0 0.0
        %1945 = vmatprep.subr.mxu0 0.0
        %1946 = vmatpush1.msra.mxu0 0.0
        %1947 = vmatprep.subr.mxu0 0.0
        %1948 = vmatpush1.msra.mxu0 0.0
        %1949 = vmatprep.subr.mxu0 0.0
        %1950 = vmatpush1.msra.mxu0 0.0
        %1951 = vmatprep.subr.mxu0 0.0
        %1952 = vmatpush1.msra.mxu0 0.0
        %1953 = vmatprep.subr.mxu0 0.0
        %1954 = vmatpush1.msra.mxu0 0.0
        %1955 = vmatprep.subr.mxu0 0.0
        %1956 = vmatpush1.msra.mxu0 0.0
        %1957 = vmatprep.subr.mxu0 0.0
        %1958 = vmatpush1.msra.mxu0 0.0
        %1959 = vmatprep.subr.mxu0 0.0
        %1960 = vmatpush1.msra.mxu0 0.0
        %1961 = vmatprep.subr.mxu0 0.0
        %1962 = vmatpush1.msra.mxu0 0.0
        %1963 = vmatprep.subr.mxu0 0.0
        %1964 = vmatpush1.msra.mxu0 0.0
        %1965 = vmatprep.subr.mxu0 0.0
        %1966 = vmatpush1.msra.mxu0 %v1932
        %1967 = vmatprep.subr.mxu0 0.0
        %1968 = vmatpush1.msra.mxu0 %v1931
        %1969 = vmatprep.subr.mxu0 0.0
        %1970 = vmatpush2.msra.mxu0 0.0
        %1971 = vmatprep.subr.mxu0 0.0
        %1972 = vmatpush2.msra.mxu0 0.0
        %1973 = vmatprep.subr.mxu0 0.0
        %1974 = vmatpush2.msra.mxu0 0.0
        %1975 = vmatprep.subr.mxu0 0.0
        %1976 = vmatpush2.msra.mxu0 0.0
        %1977 = vmatprep.subr.mxu0 0.0
        %1978 = vmatpush2.msra.mxu0 0.0
        %1979 = vmatprep.subr.mxu0 0.0
        %1980 = vmatpush2.msra.mxu0 0.0
        %1981 = vmatprep.subr.mxu0 0.0
        %1982 = vmatpush2.msra.mxu0 0.0
        %1983 = vmatprep.subr.mxu0 0.0
        %1984 = vmatpush2.msra.mxu0 0.0
        %1985 = vmatprep.subr.mxu0 0.0
        %1986 = vmatpush2.msra.mxu0 0.0
        %1987 = vmatprep.subr.mxu0 0.0
        %1988 = vmatpush2.msra.mxu0 0.0
        %1989 = vmatprep.subr.mxu0 0.0
        %1990 = vmatpush2.msra.mxu0 0.0
        %1991 = vmatprep.subr.mxu0 0.0
        %1992 = vmatpush2.msra.mxu0 0.0
        %1993 = vmatprep.subr.mxu0 0.0
        %1994 = vmatpush2.msra.mxu0 0.0
        %1995 = vmatprep.subr.mxu0 0.0
        %1996 = vmatpush2.msra.mxu0 0.0
        %1997 = vmatprep.subr.mxu0 0.0
        %1998 = vmatpush2.msra.mxu0 0.0
        %1999 = vmatprep.subr.mxu0 0.0
        %2000 = vmatpush2.msra.mxu0 0.0
        %2001 = vmatprep.mubr.f32.mxu0 0.0
        %2002 = vmatmul.mubr.f32.gmra.mxu0 %v1935
        %v2003 = vpop.f32.mrf.mxu0
        %v2004 = vadd.f32 0.0, %v2003
        %v2005 = vpop.f32.mrf.mxu0
        %2006 = vdwg.mxu0
        %v2009 = vunpack.c.l.s4 1966171168
        %v2010 = vunpack.c.0.s8 %v2009
        %v2011 = vlaneseq
        %v2012 = vshrl.u32 %v2011, 7
        %v2013 = vsub.s32 %v2010, %v2012
        %v2014 = vrot.slane %v2004, %v2013
        %v2015 = vcombine.high %v2014, %v2014
        %v2017 = vunpack.c.l.s4 1966171168
        %v2018 = vunpack.c.0.s8 %v2017
        %v2019 = vlaneseq
        %v2020 = vshrl.u32 %v2019, 7
        %v2021 = vsub.s32 %v2018, %v2020
        %v2022 = vrot.slane %v2014, %v2021
        %v2024 = vunpack.c.l.s4 1966171168
        %v2025 = vunpack.c.0.s8 %v2024
        %v2026 = vlaneseq
        %v2027 = vshrl.u32 %v2026, 7
        %v2028 = vsub.s32 %v2025, %v2027
        %v2029 = vrot.slane %v2015, %v2028
        %v2030 = vcombine.high %v2022, %v2022
        %v2031 = vcombine.high %v2029, %v2029
        %2036 = vst.msk [vmem:[#allocation3 + $0xe] sm:$0x1] %vm510, %v2022
        %2037 = vst.msk [vmem:[#allocation3 + $0x1e] sm:$0x1] %vm510, %v2029
        %2038 = vst.msk [vmem:[#allocation3 + $0x2e] sm:$0x1] %vm510, %v2030
        %2039 = vst.msk [vmem:[#allocation3 + $0x3e] sm:$0x1] %vm510, %v2031
        %v2040 = vld [vmem:[%s4] sm:$0xff]
        %v2041 = vld [vmem:[%s4 + $0x8] sm:$0xff]
        %2042 = vrot.lane.b32.xlu0 %v403, 16
        %v2043 = vpop.permute.xlu0 %2042
        %v2044 = vsel %vm407, %v2043, 0
        %2046 = vmatprep.subr.mxu0 0.0
        %2047 = vmatpush1.msra.mxu0 0.0
        %2048 = vmatprep.subr.mxu0 0.0
        %2049 = vmatpush1.msra.mxu0 0.0
        %2050 = vmatprep.subr.mxu0 0.0
        %2051 = vmatpush1.msra.mxu0 0.0
        %2052 = vmatprep.subr.mxu0 0.0
        %2053 = vmatpush1.msra.mxu0 0.0
        %2054 = vmatprep.subr.mxu0 0.0
        %2055 = vmatpush1.msra.mxu0 0.0
        %2056 = vmatprep.subr.mxu0 0.0
        %2057 = vmatpush1.msra.mxu0 0.0
        %2058 = vmatprep.subr.mxu0 0.0
        %2059 = vmatpush1.msra.mxu0 0.0
        %2060 = vmatprep.subr.mxu0 0.0
        %2061 = vmatpush1.msra.mxu0 0.0
        %2062 = vmatprep.subr.mxu0 0.0
        %2063 = vmatpush1.msra.mxu0 0.0
        %2064 = vmatprep.subr.mxu0 0.0
        %2065 = vmatpush1.msra.mxu0 0.0
        %2066 = vmatprep.subr.mxu0 0.0
        %2067 = vmatpush1.msra.mxu0 0.0
        %2068 = vmatprep.subr.mxu0 0.0
        %2069 = vmatpush1.msra.mxu0 0.0
        %2070 = vmatprep.subr.mxu0 0.0
        %2071 = vmatpush1.msra.mxu0 0.0
        %2072 = vmatprep.subr.mxu0 0.0
        %2073 = vmatpush1.msra.mxu0 0.0
        %2074 = vmatprep.subr.mxu0 0.0
        %2075 = vmatpush1.msra.mxu0 %v2041
        %2076 = vmatprep.subr.mxu0 0.0
        %2077 = vmatpush1.msra.mxu0 %v2040
        %2078 = vmatprep.subr.mxu0 0.0
        %2079 = vmatpush2.msra.mxu0 0.0
        %2080 = vmatprep.subr.mxu0 0.0
        %2081 = vmatpush2.msra.mxu0 0.0
        %2082 = vmatprep.subr.mxu0 0.0
        %2083 = vmatpush2.msra.mxu0 0.0
        %2084 = vmatprep.subr.mxu0 0.0
        %2085 = vmatpush2.msra.mxu0 0.0
        %2086 = vmatprep.subr.mxu0 0.0
        %2087 = vmatpush2.msra.mxu0 0.0
        %2088 = vmatprep.subr.mxu0 0.0
        %2089 = vmatpush2.msra.mxu0 0.0
        %2090 = vmatprep.subr.mxu0 0.0
        %2091 = vmatpush2.msra.mxu0 0.0
        %2092 = vmatprep.subr.mxu0 0.0
        %2093 = vmatpush2.msra.mxu0 0.0
        %2094 = vmatprep.subr.mxu0 0.0
        %2095 = vmatpush2.msra.mxu0 0.0
        %2096 = vmatprep.subr.mxu0 0.0
        %2097 = vmatpush2.msra.mxu0 0.0
        %2098 = vmatprep.subr.mxu0 0.0
        %2099 = vmatpush2.msra.mxu0 0.0
        %2100 = vmatprep.subr.mxu0 0.0
        %2101 = vmatpush2.msra.mxu0 0.0
        %2102 = vmatprep.subr.mxu0 0.0
        %2103 = vmatpush2.msra.mxu0 0.0
        %2104 = vmatprep.subr.mxu0 0.0
        %2105 = vmatpush2.msra.mxu0 0.0
        %2106 = vmatprep.subr.mxu0 0.0
        %2107 = vmatpush2.msra.mxu0 0.0
        %2108 = vmatprep.subr.mxu0 0.0
        %2109 = vmatpush2.msra.mxu0 0.0
        %2110 = vmatprep.mubr.f32.mxu0 0.0
        %2111 = vmatmul.mubr.f32.gmra.mxu0 %v2044
        %v2112 = vpop.f32.mrf.mxu0
        %v2113 = vadd.f32 0.0, %v2112
        %v2114 = vpop.f32.mrf.mxu0
        %2115 = vdwg.mxu0
        %v2118 = vunpack.c.l.s4 1966171168
        %v2119 = vunpack.c.0.s8 %v2118
        %v2120 = vlaneseq
        %v2121 = vshrl.u32 %v2120, 7
        %v2122 = vsub.s32 %v2119, %v2121
        %v2123 = vrot.slane %v2113, %v2122
        %v2124 = vcombine.high %v2123, %v2123
        %v2126 = vunpack.c.l.s4 1966171168
        %v2127 = vunpack.c.0.s8 %v2126
        %v2128 = vlaneseq
        %v2129 = vshrl.u32 %v2128, 7
        %v2130 = vsub.s32 %v2127, %v2129
        %v2131 = vrot.slane %v2123, %v2130
        %v2133 = vunpack.c.l.s4 1966171168
        %v2134 = vunpack.c.0.s8 %v2133
        %v2135 = vlaneseq
        %v2136 = vshrl.u32 %v2135, 7
        %v2137 = vsub.s32 %v2134, %v2136
        %v2138 = vrot.slane %v2124, %v2137
        %v2139 = vcombine.high %v2131, %v2131
        %v2140 = vcombine.high %v2138, %v2138
        %2145 = vst.msk [vmem:[#allocation3 + $0xf] sm:$0x1] %vm510, %v2131
        %2146 = vst.msk [vmem:[#allocation3 + $0x1f] sm:$0x1] %vm510, %v2138
        %2147 = vst.msk [vmem:[#allocation3 + $0x2f] sm:$0x1] %vm510, %v2139
        %2148 = vst.msk [vmem:[#allocation3 + $0x3f] sm:$0x1] %vm510, %v2140
        %v2149 = vld [vmem:[#allocation3] sm:$0xff]
        %v2150 = vld [vmem:[#allocation3 + $0x8] sm:$0xff]
        %v2151 = vld [vmem:[#allocation3 + $0x10] sm:$0xff]
        %v2152 = vld [vmem:[#allocation3 + $0x18] sm:$0xff]
        %v2153 = vld [vmem:[#allocation3 + $0x20] sm:$0xff]
        %v2154 = vld [vmem:[#allocation3 + $0x28] sm:$0xff]
        %v2155 = vld [vmem:[#allocation3 + $0x30] sm:$0xff]
        %v2156 = vld [vmem:[#allocation3 + $0x38] sm:$0xff]
        %vm2157 = vcmask 261120
        %2158 = vst.msk [vmem:[#allocation2] sm:$0xff] %vm2157, %v2149
        %2159 = vst.msk [vmem:[#allocation2 + $0x8] sm:$0xff] %vm2157, %v2150
        %2162 = vrot.lane.b32.xlu0 %v2151, 32
        %v2163 = vpop.permute.xlu0 %2162
        %2164 = vrot.lane.b32.xlu0 %v2152, 32
        %v2165 = vpop.permute.xlu0 %2164
        %vm2168 = vcmask 523520
        %2169 = vst.msk [vmem:[#allocation2] sm:$0xff] %vm2168, %v2163
        %2170 = vst.msk [vmem:[#allocation2 + $0x8] sm:$0xff] %vm2168, %v2165
        %2173 = vrot.lane.b32.xlu0 %v2153, 64
        %v2174 = vpop.permute.xlu0 %2173
        %2175 = vrot.lane.b32.xlu0 %v2154, 64
        %v2176 = vpop.permute.xlu0 %2175
        %vm2179 = vcmask 785920
        %2180 = vst.msk [vmem:[#allocation2] sm:$0xff] %vm2179, %v2174
        %2181 = vst.msk [vmem:[#allocation2 + $0x8] sm:$0xff] %vm2179, %v2176
        %2184 = vrot.lane.b32.xlu0 %v2155, 96
        %v2185 = vpop.permute.xlu0 %2184
        %2186 = vrot.lane.b32.xlu0 %v2156, 96
        %v2187 = vpop.permute.xlu0 %2186
        %vm2190 = vcmask 1048320
        %2191 = vst.msk [vmem:[#allocation2] sm:$0xff] %vm2190, %v2185
        %2192 = vst.msk [vmem:[#allocation2 + $0x8] sm:$0xff] %vm2190, %v2187
        %v2193 = vld [vmem:[%s5] sm:$0xff]
        %v2194 = vld [vmem:[%s5 + $0x8] sm:$0xff]
        %v2195 = vld [vmem:[%s5 + $0x10] sm:$0xff]
        %v2196 = vld [vmem:[%s5 + $0x18] sm:$0xff]
        %v2197 = vld [vmem:[#allocation2] sm:$0xff]
        %v2198 = vld [vmem:[#allocation2 + $0x8] sm:$0xff]
        %v2200 = vsel %vm407, %v2193, 0
        %v2203 = vsel %vm407, %v2194, 0
        %v2206 = vsel %vm407, %v2195, 0
        %v2209 = vsel %vm407, %v2196, 0
        %2211 = vmatprep.subr.mxu0 0.0
        %2212 = vmatpush1.msra.mxu0 0.0
        %2213 = vmatprep.subr.mxu0 0.0
        %2214 = vmatpush1.msra.mxu0 0.0
        %2215 = vmatprep.subr.mxu0 0.0
        %2216 = vmatpush1.msra.mxu0 0.0
        %2217 = vmatprep.subr.mxu0 0.0
        %2218 = vmatpush1.msra.mxu0 0.0
        %2219 = vmatprep.subr.mxu0 0.0
        %2220 = vmatpush1.msra.mxu0 0.0
        %2221 = vmatprep.subr.mxu0 0.0
        %2222 = vmatpush1.msra.mxu0 0.0
        %2223 = vmatprep.subr.mxu0 0.0
        %2224 = vmatpush1.msra.mxu0 0.0
        %2225 = vmatprep.subr.mxu0 0.0
        %2226 = vmatpush1.msra.mxu0 0.0
        %2227 = vmatprep.subr.mxu0 0.0
        %2228 = vmatpush1.msra.mxu0 0.0
        %2229 = vmatprep.subr.mxu0 0.0
        %2230 = vmatpush1.msra.mxu0 0.0
        %2231 = vmatprep.subr.mxu0 0.0
        %2232 = vmatpush1.msra.mxu0 0.0
        %2233 = vmatprep.subr.mxu0 0.0
        %2234 = vmatpush1.msra.mxu0 0.0
        %2235 = vmatprep.subr.mxu0 0.0
        %2236 = vmatpush1.msra.mxu0 0.0
        %2237 = vmatprep.subr.mxu0 0.0
        %2238 = vmatpush1.msra.mxu0 0.0
        %2239 = vmatprep.subr.mxu0 0.0
        %2240 = vmatpush1.msra.mxu0 %v2198
        %2241 = vmatprep.subr.mxu0 0.0
        %2242 = vmatpush1.msra.mxu0 %v2197
        %2243 = vmatprep.subr.mxu0 0.0
        %2244 = vmatpush2.msra.mxu0 0.0
        %2245 = vmatprep.subr.mxu0 0.0
        %2246 = vmatpush2.msra.mxu0 0.0
        %2247 = vmatprep.subr.mxu0 0.0
        %2248 = vmatpush2.msra.mxu0 0.0
        %2249 = vmatprep.subr.mxu0 0.0
        %2250 = vmatpush2.msra.mxu0 0.0
        %2251 = vmatprep.subr.mxu0 0.0
        %2252 = vmatpush2.msra.mxu0 0.0
        %2253 = vmatprep.subr.mxu0 0.0
        %2254 = vmatpush2.msra.mxu0 0.0
        %2255 = vmatprep.subr.mxu0 0.0
        %2256 = vmatpush2.msra.mxu0 0.0
        %2257 = vmatprep.subr.mxu0 0.0
        %2258 = vmatpush2.msra.mxu0 0.0
        %2259 = vmatprep.subr.mxu0 0.0
        %2260 = vmatpush2.msra.mxu0 0.0
        %2261 = vmatprep.subr.mxu0 0.0
        %2262 = vmatpush2.msra.mxu0 0.0
        %2263 = vmatprep.subr.mxu0 0.0
        %2264 = vmatpush2.msra.mxu0 0.0
        %2265 = vmatprep.subr.mxu0 0.0
        %2266 = vmatpush2.msra.mxu0 0.0
        %2267 = vmatprep.subr.mxu0 0.0
        %2268 = vmatpush2.msra.mxu0 0.0
        %2269 = vmatprep.subr.mxu0 0.0
        %2270 = vmatpush2.msra.mxu0 0.0
        %2271 = vmatprep.subr.mxu0 0.0
        %2272 = vmatpush2.msra.mxu0 0.0
        %2273 = vmatprep.subr.mxu0 0.0
        %2274 = vmatpush2.msra.mxu0 0.0
        %2275 = vmatprep.mubr.f32.mxu0 0.0
        %2276 = vmatmul.mubr.f32.gmra.mxu0 %v2200
        %v2277 = vpop.f32.mrf.mxu0
        %v2278 = vadd.f32 0.0, %v2277
        %v2279 = vpop.f32.mrf.mxu0
        %2280 = vmatprep.mubr.f32.mxu0 0.0
        %2281 = vmatmul.mubr.f32.gmra.mxu0 %v2203
        %v2282 = vpop.f32.mrf.mxu0
        %v2283 = vadd.f32 0.0, %v2282
        %v2284 = vpop.f32.mrf.mxu0
        %2285 = vmatprep.mubr.f32.mxu0 0.0
        %2286 = vmatmul.mubr.f32.gmra.mxu0 %v2206
        %v2287 = vpop.f32.mrf.mxu0
        %v2288 = vadd.f32 0.0, %v2287
        %v2289 = vpop.f32.mrf.mxu0
        %2290 = vmatprep.mubr.f32.mxu0 0.0
        %2291 = vmatmul.mubr.f32.gmra.mxu0 %v2209
        %v2292 = vpop.f32.mrf.mxu0
        %v2293 = vadd.f32 0.0, %v2292
        %v2294 = vpop.f32.mrf.mxu0
        %2295 = vdwg.mxu0
        %v2296 = vld [vmem:[%s317] sm:$0xf]
        %s2298 = vtos %v2296
        %v2299 = vstv %s2298
        %v2301 = vadd.f32 %v2278, %v2299
        %v2302 = vadd.f32 %v2283, %v2299
        %v2303 = vadd.f32 %v2288, %v2299
        %v2304 = vadd.f32 %v2293, %v2299
        %2305 = vst.msk [vmem:[%s299] sm:$0xff] %vm2157, %v2301
        %2306 = vst.msk [vmem:[%s299 + $0x8] sm:$0xff] %vm2157, %v2302
        %2307 = vst.msk [vmem:[%s299 + $0x10] sm:$0xff] %vm2157, %v2303
        %2308 = vst.msk [vmem:[%s299 + $0x18] sm:$0xff] %vm2157, %v2304
        %v2309 = vrot.slane %v2296, 1
        %s2310 = vtos %v2309
        %v2311 = vstv %s2310
        %v2313 = vadd.f32 %v2278, %v2311
        %v2314 = vadd.f32 %v2283, %v2311
        %v2315 = vadd.f32 %v2288, %v2311
        %v2316 = vadd.f32 %v2293, %v2311
        %2321 = vrot.lane.b32.xlu0 %v2313, 96
        %v2322 = vpop.permute.xlu0 %2321
        %2323 = vrot.lane.b32.xlu0 %v2314, 96
        %v2324 = vpop.permute.xlu0 %2323
        %2325 = vrot.lane.b32.xlu0 %v2315, 96
        %v2326 = vpop.permute.xlu0 %2325
        %2327 = vrot.lane.b32.xlu0 %v2316, 96
        %v2328 = vpop.permute.xlu0 %2327
        %s2333 = scalar_lea.vmem %s299, 32 [#allocation4]
        %2334 = vst.msk [vmem:[%s2333] sm:$0xff] %vm2157, %v2322
        %2335 = vst.msk [vmem:[%s2333 + $0x8] sm:$0xff] %vm2157, %v2324
        %2336 = vst.msk [vmem:[%s2333 + $0x10] sm:$0xff] %vm2157, %v2326
        %2337 = vst.msk [vmem:[%s2333 + $0x18] sm:$0xff] %vm2157, %v2328
        %v2338 = vrot.slane %v2296, 2
        %s2339 = vtos %v2338
        %v2340 = vstv %s2339
        %v2342 = vadd.f32 %v2278, %v2340
        %v2343 = vadd.f32 %v2283, %v2340
        %v2344 = vadd.f32 %v2288, %v2340
        %v2345 = vadd.f32 %v2293, %v2340
        %2350 = vrot.lane.b32.xlu0 %v2342, 64
        %v2351 = vpop.permute.xlu0 %2350
        %2352 = vrot.lane.b32.xlu0 %v2343, 64
        %v2353 = vpop.permute.xlu0 %2352
        %2354 = vrot.lane.b32.xlu0 %v2344, 64
        %v2355 = vpop.permute.xlu0 %2354
        %2356 = vrot.lane.b32.xlu0 %v2345, 64
        %v2357 = vpop.permute.xlu0 %2356
        %s2362 = scalar_lea.vmem %s299, 64 [#allocation4]
        %2363 = vst.msk [vmem:[%s2362] sm:$0xff] %vm2157, %v2351
        %2364 = vst.msk [vmem:[%s2362 + $0x8] sm:$0xff] %vm2157, %v2353
        %2365 = vst.msk [vmem:[%s2362 + $0x10] sm:$0xff] %vm2157, %v2355
        %2366 = vst.msk [vmem:[%s2362 + $0x18] sm:$0xff] %vm2157, %v2357
        %v2367 = vrot.slane %v2296, 3
        %s2368 = vtos %v2367
        %v2369 = vstv %s2368
        %v2371 = vadd.f32 %v2278, %v2369
        %v2372 = vadd.f32 %v2283, %v2369
        %v2373 = vadd.f32 %v2288, %v2369
        %v2374 = vadd.f32 %v2293, %v2369
        %2379 = vrot.lane.b32.xlu0 %v2371, 32
        %v2380 = vpop.permute.xlu0 %2379
        %2381 = vrot.lane.b32.xlu0 %v2372, 32
        %v2382 = vpop.permute.xlu0 %2381
        %2383 = vrot.lane.b32.xlu0 %v2373, 32
        %v2384 = vpop.permute.xlu0 %2383
        %2385 = vrot.lane.b32.xlu0 %v2374, 32
        %v2386 = vpop.permute.xlu0 %2385
        %s2391 = scalar_lea.vmem %s299, 96 [#allocation4]
        %2392 = vst.msk [vmem:[%s2391] sm:$0xff] %vm2157, %v2380
        %2393 = vst.msk [vmem:[%s2391 + $0x8] sm:$0xff] %vm2157, %v2382
        %2394 = vst.msk [vmem:[%s2391 + $0x10] sm:$0xff] %vm2157, %v2384
        %2395 = vst.msk [vmem:[%s2391 + $0x18] sm:$0xff] %vm2157, %v2386
        %s2396 = sand.u32 %s188, 1
        %s2397 = scalar_lea.sflag [#allocation5], %s2396
        %s2398 = sand.u32 %s188, 1
        %s2399 = smul.addr %s2398, 128
        %s2400 = scalar_lea.vmem [#allocation4], %s2399
        // Predicated region
        $region45: #{tpu_custom_call.1} parent=43 // pred_check
          %p2401 = pneg %p198
        $region46: #{tpu_custom_call.1} parent=43 // pred_check_branch
          %2403 = sbr.rel (%p2401) target = $region48
        $region47: #{tpu_custom_call.1} parent=43 // pred_region
          %s2404 = smul.u32 4, %s25
          %s2406 = ssub.s32 2048, 2048
          %2407 = vsyncadd %s2397, %s2406
          %s2408 = smul.addr %s2404, 4
          %s2409 = smul.addr %s24, 16
          %s2410 = sadd.s32 %s2408, %s2409
          %s2411 = smul.addr %s2410, 128
          %s2412 = scalar_lea.hbm %s6, %s2411
          %s2413 = sshll.u32 %s2400, 4
          %s2414 = int_to_ptr.vmem [resolvable:$true] %s2413
          %2419 = dma.vmem_to_hbm [thread:$0]  %s2414, 2048, %s2412, %s2397, 128, 128, 8
        $region48: #{tpu_custom_call.1} parent=43 // pred_fallthru
          _
      $region44: #{tpu_custom_call.1} parent=5 // pred_fallthru
        _
      %p2420 = scmp.le.s32.totalorder 2, %s15
      // Predicated region
      $region49: #{tpu_custom_call.1} parent=5 // pred_check
        %p2421 = pneg %p2420
      $region50: #{tpu_custom_call.1} parent=5 // pred_check_branch
        %2423 = sbr.rel (%p2421) target = $region52
      $region51: #{tpu_custom_call.1} parent=5 // pred_region
        %s2424 = ssub.s32 %s15, 2
        // Predicated region
        $region53: #{tpu_custom_call.1} parent=51 // pred_check
          %p2425 = pneg %p204
        $region54: #{tpu_custom_call.1} parent=51 // pred_check_branch
          %2427 = sbr.rel (%p2425) target = $region56
        $region55: #{tpu_custom_call.1} parent=51 // pred_region
          %s2428 = sand.u32 %s189, 1
          %s2429 = scalar_lea.sflag [#allocation5], %s2428
          %s2430 = sand.u32 %s189, 1
          %s2431 = smul.addr %s2430, 128
          %s2432 = scalar_lea.vmem [#allocation4], %s2431
          %2433 = dma.done %s2429, 2048
        $region56: #{tpu_custom_call.1} parent=51 // pred_fallthru
          _
      $region52: #{tpu_custom_call.1} parent=5 // pred_fallthru
        _
    $region6: #{tpu_custom_call.1} parent=1 // loop_footer
      %s19 = sadd.s32 1, %s15
    $region7: #{tpu_custom_call.1} parent=1 // loop_footer_branch
      %14 = sbr.rel target = $region3
    $region8: #{tpu_custom_call.1} parent=1 // loop_exit
      _
    %2434 = vsyncpa [#allocation5], 1
    %s2435 = scalar_lea.sflag [#allocation5], 1
    %2436 = vsyncpa %s2435, 1

</llo_original>
